<compile_context>
chip_gen: v7x
topology: tpu7x:2x2x1
jax: 0.10.0
libtpu: 0.0.40
codegen_flags: <defaults>
</compile_context>

<pallas_src>
from typing import NamedTuple, Optional

import jax
import jax.numpy as jnp
from jax.experimental import pallas as pl
from jax.experimental.pallas import tpu as pltpu


# ----------------------------------------------------------------------------
# Kernel
# ----------------------------------------------------------------------------
def _linear_kernel(x_ref, w_ref, b_ref, o_ref, acc_ref):
    # x_ref: (tm, tk)  w_ref: (tk, tn)  b_ref: (1, tn)
    # o_ref: (tm, tn)  acc_ref: (tm, tn) f32 scratch (resident across k)
    @pl.when(pl.program_id(2) == 0)
    def _():
        acc_ref[...] = jnp.zeros_like(acc_ref)

    acc_ref[...] += jnp.dot(
        x_ref[...], w_ref[...], preferred_element_type=jnp.float32
    )

    @pl.when(pl.program_id(2) == pl.num_programs(2) - 1)
    def _():
        o_ref[...] = (
            acc_ref[...] + b_ref[...].astype(jnp.float32)
        ).astype(o_ref.dtype)


# ----------------------------------------------------------------------------
# Parameter prep (done ONCE, outside the per-call hot path)
# ----------------------------------------------------------------------------
def _round_up(x, m):
    return (x + m - 1) // m * m


class LinearHeadParams(NamedTuple):
    w_t: jax.Array   # [Ep, Dp] pre-transposed, zero-padded, compute dtype
    b: jax.Array     # [1, Dp]  zero-padded bias
    E: int           # true embed size
    D: int           # true dim_out
    tn: int          # output-column tile the padding was derived for
    tk: int          # reduction tile the padding was derived for


def prepare_linear_head(weight, bias, *, tn=512, tk=1024,
                        compute_dtype: Optional[jnp.dtype] = None):
    """weight: [D, E] (PyTorch nn.Linear layout), bias: [D]."""
    D, E = weight.shape
    assert bias.shape == (D,)
    if compute_dtype is not None:
        weight = weight.astype(compute_dtype)

    Ep = _round_up(E, 128)
    Dp = _round_up(D, 128)
    tn = min(tn, Dp)
    tk = min(tk, Ep)
    Ep = _round_up(Ep, tk)
    Dp = _round_up(Dp, tn)

    # Zero padding keeps the math exact: padded K rows contribute 0 to the dot,
    # padded output cols are sliced off after the call.
    w_t = jnp.zeros((Ep, Dp), weight.dtype).at[:E, :D].set(weight.T)
    b = jnp.zeros((1, Dp), bias.dtype).at[0, :D].set(bias)
    return LinearHeadParams(w_t=w_t, b=b, E=E, D=D, tn=tn, tk=tk)


# ----------------------------------------------------------------------------
# Forward
# ----------------------------------------------------------------------------
_SMALL_FALLBACK_FLOPS = 2 * (1 << 22)  # below ~8 MFLOP launch overhead dominates


def _select_tm(Bp0, tm_max, single_j_tile):
    """Pick a batch tile that minimizes padding waste; prefer the largest tile
    among equal-waste candidates.  If the j axis has a single tile, make sure
    the i axis exposes >=2 tiles so both v7x TensorCores get work."""
    tm_max = max(tm_max, 8)
    cands = {c for c in (1024, 512, 256, 128, 64, 32, 16, 8) if c <= tm_max}
    if Bp0 <= tm_max:
        cands.add(Bp0)

    def waste(c):
        return _round_up(Bp0, c) - Bp0

    tm = min(cands, key=lambda c: (waste(c), -c))
    if single_j_tile and _round_up(Bp0, tm) // tm == 1 and Bp0 >= 16:
        half = _round_up((Bp0 + 1) // 2, 8)
        tm = min(tm, half)
    return tm


def linear_head_apply(x, params: LinearHeadParams, *, tm=512,
                      out_dtype=None, interpret=False):
    """y = x @ weight.T + bias, with weight/bias already prepped."""
    B, E = x.shape
    assert E == params.E, "x feature dim must match prepared weight"
    D = params.D
    out_dtype = jnp.dtype(out_dtype) if out_dtype is not None else x.dtype

    # Tiny-problem fallback (typical dim_out=2 classification head).
    if 2 * B * E * D < _SMALL_FALLBACK_FLOPS:
        xw = jnp.dot(x.astype(params.w_t.dtype), params.w_t[:E, :D],
                     preferred_element_type=jnp.float32)
        return (xw + params.b[:, :D].astype(jnp.float32)).astype(out_dtype)

    Ep, Dp = params.w_t.shape
    tn, tk = params.tn, params.tk

    Bp0 = _round_up(B, 8)
    tm = _select_tm(Bp0, tm, single_j_tile=(Dp // tn == 1))
    Bp = _round_up(Bp0, tm)

    x_comp = x.astype(params.w_t.dtype)
    if Bp == B and Ep == E:
        x_p = x_comp                         # no copy when already aligned
    else:
        x_p = jnp.zeros((Bp, Ep), x_comp.dtype).at[:B, :E].set(x_comp)

    grid = (Bp // tm, Dp // tn, Ep // tk)

    # Size-derived VMEM budget: double-buffered inputs + output + f32 acc,
    # plus headroom; capped at 48 MiB so it still fits v7x's 64 MiB VMEM.
    in_bytes = jnp.dtype(x_comp.dtype).itemsize
    out_bytes = jnp.dtype(out_dtype).itemsize
    working = (2 * (tm * tk + tk * tn) * in_bytes
               + 2 * tm * tn * out_bytes
               + tm * tn * 4
               + 2 * tn * jnp.dtype(params.b.dtype).itemsize)
    vmem_limit = int(min(max(int(working * 1.25) + (2 << 20), 16 << 20), 48 << 20))

    out_p = pl.pallas_call(
        _linear_kernel,
        out_shape=jax.ShapeDtypeStruct((Bp, Dp), out_dtype),
        grid_spec=pltpu.PrefetchScalarGridSpec(
            num_scalar_prefetch=0,
            grid=grid,
            in_specs=[
                pl.BlockSpec((tm, tk), lambda i, j, k: (i, k)),   # x tile
                pl.BlockSpec((tk, tn), lambda i, j, k: (k, j)),   # W^T tile
                pl.BlockSpec((1, tn), lambda i, j, k: (0, j)),    # bias tile
            ],
            out_specs=pl.BlockSpec((tm, tn), lambda i, j, k: (i, j)),
            scratch_shapes=[pltpu.VMEM((tm, tn), jnp.float32)],
        ),
        compiler_params=pltpu.CompilerParams(
            dimension_semantics=("parallel", "parallel", "arbitrary"),
            vmem_limit_bytes=vmem_limit,
        ),
        interpret=interpret,
    )(x_p, params.w_t, params.b)

    return out_p[:B, :D]


def linear_head(x, weight, bias, *, tm=512, tn=512, tk=1024,
                compute_dtype=None, out_dtype=None):
    """Convenience one-shot wrapper: y = x @ weight.T + bias (torch nn.Linear).

    For repeated calls, use prepare_linear_head() once + linear_head_apply().
    """
    params = prepare_linear_head(weight, bias, tn=tn, tk=tk,
                                 compute_dtype=compute_dtype)
    return linear_head_apply(x, params, tm=tm, out_dtype=out_dtype)


# ----------------------------------------------------------------------------
# Self-test
# ----------------------------------------------------------------------------
if __name__ == "__main__":
    key = jax.random.PRNGKey(0)

    # --- Case 1: tiny shapes matching the module's typical use (dim_out=2). ---
    batch, embed_size, dim_out = 8, 32, 2
    k1, k2, k3, key = jax.random.split(key, 4)
    bound = 1.0 / (embed_size ** 0.5)
    x = jax.random.normal(k1, (batch, embed_size), dtype=jnp.float32)
    weight = jax.random.uniform(k2, (dim_out, embed_size), dtype=jnp.float32,
                                minval=-bound, maxval=bound)
    bias = jax.random.uniform(k3, (dim_out,), dtype=jnp.float32,
                              minval=-bound, maxval=bound)

    out = jax.block_until_ready(linear_head(x, weight, bias))
    ref = x @ weight.T + bias
    assert out.shape == (batch, dim_out)
    assert jnp.allclose(out, ref, atol=1e-5, rtol=1e-5)

    # --- Case 2: shapes that exercise the tiled Pallas path (f32). -----------
    B2, E2, D2 = 384, 512, 256
    k4, k5, k6 = jax.random.split(key, 3)
    bound2 = 1.0 / (E2 ** 0.5)
    x2 = jax.random.normal(k4, (B2, E2), dtype=jnp.float32)
    w2 = jax.random.uniform(k5, (D2, E2), dtype=jnp.float32,
                            minval=-bound2, maxval=bound2)
    b2 = jax.random.uniform(k6, (D2,), dtype=jnp.float32,
                            minval=-bound2, maxval=bound2)

    params_f32 = prepare_linear_head(w2, b2)          # one-time weight prep
    out2 = jax.block_until_ready(linear_head_apply(x2, params_f32))
    ref2 = x2 @ w2.T + b2
    assert out2.shape == (B2, D2)
    assert jnp.allclose(out2, ref2, atol=1e-4, rtol=1e-4)

    # --- Case 3: bf16 compute path (f32 accumulation, f32 output). -----------
    params_bf16 = prepare_linear_head(w2, b2, compute_dtype=jnp.bfloat16)
    out3 = jax.block_until_ready(
        linear_head_apply(x2, params_bf16, out_dtype=jnp.float32))
    ref3 = jnp.dot(x2.astype(jnp.bfloat16), w2.T.astype(jnp.bfloat16),
                   preferred_element_type=jnp.float32) + b2
    assert out3.shape == (B2, D2)
    assert jnp.allclose(out3, ref3, atol=1e-2, rtol=1e-2)

    print("KERNEL_OK")
</pallas_src>

<mosaic_0001>
module attributes {stable_mosaic.version = 11 : i64} {
  func.func @_linear_kernel(%arg0: i32, %arg1: i32, %arg2: i32, %arg3: memref<192x512xf32, #tpu.memory_space<vmem>>, %arg4: memref<512x256xf32, #tpu.memory_space<vmem>>, %arg5: memref<1x256xf32, #tpu.memory_space<vmem>>, %arg6: memref<192x256xf32, #tpu.memory_space<vmem>>, %arg7: memref<192x256xf32, #tpu.memory_space<vmem>>) attributes {dimension_semantics = [#tpu.dimension_semantics<parallel>, #tpu.dimension_semantics<parallel>, #tpu.dimension_semantics<arbitrary>], iteration_bounds = array<i64: 2, 1, 1>, scalar_prefetch = 0 : i64, scratch_operands = 1 : i64, tpu.core_type = #tpu.core_type<tc>, window_params = [{transform_indices = @transform_0, window_bounds = array<i64: 192, 512>}, {transform_indices = @transform_1, window_bounds = array<i64: 512, 256>}, {transform_indices = @transform_2, window_bounds = array<i64: 1, 256>}, {transform_indices = @transform_3, window_bounds = array<i64: 192, 256>}]} {
    %c0_i32 = arith.constant 0 : i32
    %0 = arith.cmpi eq, %arg2, %c0_i32 : i32
    %1 = arith.extui %0 : i1 to i32
    %c0_i32_0 = arith.constant 0 : i32
    %2 = arith.cmpi ne, %1, %c0_i32_0 : i32
    scf.if %2 {
      %cst_10 = arith.constant 0.000000e+00 : f32
      %12 = vector.broadcast %cst_10 : f32 to vector<192x256xf32>
      %c0_11 = arith.constant 0 : index
      %c0_12 = arith.constant 0 : index
      %13 = vector.load %arg7[%c0_11, %c0_12] : memref<192x256xf32, #tpu.memory_space<vmem>>, vector<192x256xf32>
      tpu.vector_store %arg7[%c0_11, %c0_12], %12 {strides = array<i32>} : memref<192x256xf32, #tpu.memory_space<vmem>>, vector<192x256xf32>,
    } else {
    }
    %c0 = arith.constant 0 : index
    %c0_1 = arith.constant 0 : index
    %3 = vector.load %arg7[%c0, %c0_1] : memref<192x256xf32, #tpu.memory_space<vmem>>, vector<192x256xf32>
    %c0_2 = arith.constant 0 : index
    %c0_3 = arith.constant 0 : index
    %4 = vector.load %arg3[%c0_2, %c0_3] : memref<192x512xf32, #tpu.memory_space<vmem>>, vector<192x512xf32>
    %c0_4 = arith.constant 0 : index
    %c0_5 = arith.constant 0 : index
    %5 = vector.load %arg4[%c0_4, %c0_5] : memref<512x256xf32, #tpu.memory_space<vmem>>, vector<512x256xf32>
    %cst = arith.constant dense<0.000000e+00> : vector<192x256xf32>
    %6 = tpu.matmul %4, %5, %cst {dimension_numbers = #tpu.dot_dimension_numbers<[1], [0], [0], [1], [0, 0, 1, 1], [], []>} : vector<192x512xf32>, vector<512x256xf32>, vector<192x256xf32> -> vector<192x256xf32>
    %7 = arith.addf %3, %6 : vector<192x256xf32>
    %c0_6 = arith.constant 0 : index
    %c0_7 = arith.constant 0 : index
    %8 = vector.load %arg7[%c0_6, %c0_7] : memref<192x256xf32, #tpu.memory_space<vmem>>, vector<192x256xf32>
    tpu.vector_store %arg7[%c0_6, %c0_7], %7 {strides = array<i32>} : memref<192x256xf32, #tpu.memory_space<vmem>>, vector<192x256xf32>,
    %c0_i32_8 = arith.constant 0 : i32
    %9 = arith.cmpi eq, %arg2, %c0_i32_8 : i32
    %10 = arith.extui %9 : i1 to i32
    %c0_i32_9 = arith.constant 0 : i32
    %11 = arith.cmpi ne, %10, %c0_i32_9 : i32
    scf.if %11 {
      %c0_10 = arith.constant 0 : index
      %c0_11 = arith.constant 0 : index
      %12 = vector.load %arg7[%c0_10, %c0_11] : memref<192x256xf32, #tpu.memory_space<vmem>>, vector<192x256xf32>
      %c0_12 = arith.constant 0 : index
      %c0_13 = arith.constant 0 : index
      %13 = vector.load %arg5[%c0_12, %c0_13] : memref<1x256xf32, #tpu.memory_space<vmem>>, vector<1x256xf32>
      %14 = vector.broadcast %13 : vector<1x256xf32> to vector<192x256xf32>
      %15 = arith.addf %12, %14 : vector<192x256xf32>
      %c0_14 = arith.constant 0 : index
      %c0_15 = arith.constant 0 : index
      %16 = vector.load %arg6[%c0_14, %c0_15] : memref<192x256xf32, #tpu.memory_space<vmem>>, vector<192x256xf32>
      tpu.vector_store %arg6[%c0_14, %c0_15], %15 {strides = array<i32>} : memref<192x256xf32, #tpu.memory_space<vmem>>, vector<192x256xf32>,
    } else {
    }
    return
  }
  func.func @transform_0(%arg0: i32, %arg1: i32, %arg2: i32) -> (i32, i32) {
    %c0_i32 = arith.constant 0 : i32
    return %arg0, %arg2 : i32, i32
  }
  func.func @transform_1(%arg0: i32, %arg1: i32, %arg2: i32) -> (i32, i32) {
    %c0_i32 = arith.constant 0 : i32
    return %arg2, %arg1 : i32, i32
  }
  func.func @transform_2(%arg0: i32, %arg1: i32, %arg2: i32) -> (i32, i32) {
    %c0_i32 = arith.constant 0 : i32
    %c0_i32_0 = arith.constant 0 : i32
    return %c0_i32, %arg1 : i32, i32
  }
  func.func @transform_3(%arg0: i32, %arg1: i32, %arg2: i32) -> (i32, i32) {
    %c0_i32 = arith.constant 0 : i32
    return %arg0, %arg1 : i32, i32
  }
}

</mosaic_0001>

<llo_original>
// kernel: tpu_custom_call.1
$region0: #{tpu_custom_call.1}
  #allocation0 [shape = 'u32[]', space=smem, size = 0x4, offset = 0x4, fixed_abs, tag = 'smem constant byte address 0x4 - core index']
  #allocation1 [shape = 'u32[144,128]{1,0:T(1,128)}', space=vmem, size = 0x12000, scoped, tag = 'internal scratch']
  #allocation2 [shape = 'f32[192,256]{1,0:T(8,128)}', space=vmem, size = 0x30000, scoped, tag = 'scratch operand']
  %s0 = inlined_call_operand.hbm [shape: f32[384,512], index: 0, kind: input, shape index: {}]
  %s1 = inlined_call_operand.hbm [shape: f32[512,256], index: 1, kind: input, shape index: {}]
  %s2 = inlined_call_operand.vmem [shape: f32[1,256], index: 2, kind: input, shape index: {}]
  %s3 = inlined_call_operand.hbm [shape: f32[384,256], index: 3, kind: output, shape index: {}]
  %s4 = sld [smem:[#allocation0]]
  $region61: #{tpu_custom_call.1} parent=0
    _
  %s6 = ssub.s32 1, %s4
  %s7 = scalar_select 0, %s6, %s4
  $region1: #{tpu_custom_call.1} parent=0
    #allocation3 [shape = 'u8[786432]{0}', space=vmem, size = 0xc0000, scoped, tag = 'input window, operand 0']
    #allocation4 [shape = 's32[2]{0}', space=sflag, size = 0x8, scoped, tag = 'scoped memory for tpu_custom_call.1']
    #allocation5 [shape = 's32[2]{0}', space=sflag, size = 0x8, scoped, tag = 'scoped memory for tpu_custom_call.1']
    #allocation6 [shape = 'u8[524288]{0}', space=vmem, size = 0x80000, scoped, tag = 'input window, operand 1, single buffered']
    #allocation7 [shape = 's32[1]{0}', space=sflag, size = 0x4, scoped, tag = 'scoped memory for tpu_custom_call.1']
    #allocation8 [shape = 'u8[393216]{0}', space=vmem, size = 0x60000, scoped, tag = 'output window, operand 0']
    %8 = vsyncpa [#allocation4], 0
    %s9 = scalar_lea.sflag [#allocation4], 1
    %10 = vsyncpa %s9, 0
    %11 = vsyncpa [#allocation7], 0
    %12 = vsyncpa [#allocation5], 0
    %s13 = scalar_lea.sflag [#allocation5], 1
    %14 = vsyncpa %s13, 0
    loop: start=0, step=1, limit=4
    $region2: #{tpu_custom_call.1} parent=1 // loop_pre_header
      _
    $region3: #{tpu_custom_call.1} parent=1 // loop_header
      %s16 = sphi 0, %s20
      %p17 = scmp.ge.s32.totalorder %s16, 4
      %s23 = sphi 0, %s42
      %s24 = sphi 0, %s38
      %s25 = sphi 0, %s34
      %s26 = sphi 0, %s23
      %s27 = sphi 0, %s24
      %s28 = sphi 0, %s25
      %s29 = sphi 0, %s26
      %s30 = sphi 0, %s27
      %s31 = sphi 0, %s28
      %s47 = sphi 0, %s49
      %s50 = sphi 0, %s47
      %s51 = sphi 0, %s50
      %s67 = sphi 0, %s51
      %s75 = sphi 0, %s77
      %s78 = sphi 0, %s75
      %s79 = sphi 0, %s78
      %s95 = sphi 0, %s79
      %s101 = sphi 0, %s103
      %s104 = sphi 0, %s101
      %s105 = sphi 0, %s104
      %s121 = sphi 0, %s105
      %s129 = sphi 0, %s131
      %s132 = sphi 0, %s129
      %s133 = sphi 0, %s132
      %s149 = sphi 0, %s133
    $region4: #{tpu_custom_call.1} parent=1 // loop_header_branch
      %19 = sbr.rel (%p17) target = $region8
    $region5: #{tpu_custom_call.1} parent=1 // loop_body
      %s21 = ssub.s32 %s16, 1
      %s22 = ssub.s32 %s16, 2
      %s32 = sadd.s32 1, %s25
      %p33 = scmp.ge.s32.totalorder %s32, 1
      %s34 = scalar_select %p33, 0, %s32
      %s35 = sadd.s32 1, %s24
      %s36 = scalar_select %p33, %s35, %s24
      %p37 = scmp.ge.s32.totalorder %s36, 1
      %s38 = scalar_select %p37, 0, %s36
      %s39 = sadd.s32 1, %s23
      %s40 = scalar_select %p37, %s39, %s23
      %p41 = scmp.ge.s32.totalorder %s40, 2
      %s42 = scalar_select %p41, 0, %s40
      %s43 = ssub.s32 %s23, %s42
      %s44 = ssub.s32 %s25, %s34
      %s45 = sor.u32 %s43, %s44
      %p46 = scmp.eq.s32.totalorder %s45, 0
      %s48 = sadd.s32 %s47, 1
      %s49 = scalar_select %p46, %s47, %s48
      %p52 = pneg %p46
      %p53 = scmp.eq.s32.totalorder %s16, 1
      %p54 = por %p52, %p53
      %p55 = scmp.ne.s32.totalorder %s47, %s50
      %p56 = scmp.eq.s32.totalorder %s16, 0
      %p57 = por %p55, %p56
      %p58 = scmp.ne.s32.totalorder %s47, %s50
      %p59 = scmp.eq.s32.totalorder %s21, 1
      %p60 = por %p58, %p59
      %p61 = scmp.ne.s32.totalorder %s50, %s51
      %p62 = scmp.eq.s32.totalorder %s21, 0
      %p63 = por %p61, %p62
      %p64 = scmp.ne.s32.totalorder %s50, %s51
      %p65 = scmp.eq.s32.totalorder %s22, 1
      %p66 = por %p64, %p65
      %p68 = scmp.ne.s32.totalorder %s51, %s67
      %p69 = scmp.eq.s32.totalorder %s22, 0
      %p70 = por %p68, %p69
      %s71 = ssub.s32 %s25, %s34
      %s72 = ssub.s32 %s24, %s38
      %s73 = sor.u32 %s71, %s72
      %p74 = scmp.eq.s32.totalorder %s73, 0
      %s76 = sadd.s32 %s75, 1
      %s77 = scalar_select %p74, %s75, %s76
      %p80 = pneg %p74
      %p81 = scmp.eq.s32.totalorder %s16, 1
      %p82 = por %p80, %p81
      %p83 = scmp.ne.s32.totalorder %s75, %s78
      %p84 = scmp.eq.s32.totalorder %s16, 0
      %p85 = por %p83, %p84
      %p86 = scmp.ne.s32.totalorder %s75, %s78
      %p87 = scmp.eq.s32.totalorder %s21, 1
      %p88 = por %p86, %p87
      %p89 = scmp.ne.s32.totalorder %s78, %s79
      %p90 = scmp.eq.s32.totalorder %s21, 0
      %p91 = por %p89, %p90
      %p92 = scmp.ne.s32.totalorder %s78, %s79
      %p93 = scmp.eq.s32.totalorder %s22, 1
      %p94 = por %p92, %p93
      %p96 = scmp.ne.s32.totalorder %s79, %s95
      %p97 = scmp.eq.s32.totalorder %s22, 0
      %p98 = por %p96, %p97
      %s99 = ssub.s32 %s24, %s38
      %p100 = scmp.eq.s32.totalorder %s99, 0
      %s102 = sadd.s32 %s101, 1
      %s103 = scalar_select %p100, %s101, %s102
      %p106 = pneg %p100
      %p107 = scmp.eq.s32.totalorder %s16, 1
      %p108 = por %p106, %p107
      %p109 = scmp.ne.s32.totalorder %s101, %s104
      %p110 = scmp.eq.s32.totalorder %s16, 0
      %p111 = por %p109, %p110
      %p112 = scmp.ne.s32.totalorder %s101, %s104
      %p113 = scmp.eq.s32.totalorder %s21, 1
      %p114 = por %p112, %p113
      %p115 = scmp.ne.s32.totalorder %s104, %s105
      %p116 = scmp.eq.s32.totalorder %s21, 0
      %p117 = por %p115, %p116
      %p118 = scmp.ne.s32.totalorder %s104, %s105
      %p119 = scmp.eq.s32.totalorder %s22, 1
      %p120 = por %p118, %p119
      %p122 = scmp.ne.s32.totalorder %s105, %s121
      %p123 = scmp.eq.s32.totalorder %s22, 0
      %p124 = por %p122, %p123
      %s125 = ssub.s32 %s23, %s42
      %s126 = ssub.s32 %s24, %s38
      %s127 = sor.u32 %s125, %s126
      %p128 = scmp.eq.s32.totalorder %s127, 0
      %s130 = sadd.s32 %s129, 1
      %s131 = scalar_select %p128, %s129, %s130
      %p134 = pneg %p128
      %p135 = scmp.eq.s32.totalorder %s16, 1
      %p136 = por %p134, %p135
      %p137 = scmp.ne.s32.totalorder %s129, %s132
      %p138 = scmp.eq.s32.totalorder %s16, 0
      %p139 = por %p137, %p138
      %p140 = scmp.ne.s32.totalorder %s129, %s132
      %p141 = scmp.eq.s32.totalorder %s21, 1
      %p142 = por %p140, %p141
      %p143 = scmp.ne.s32.totalorder %s132, %s133
      %p144 = scmp.eq.s32.totalorder %s21, 0
      %p145 = por %p143, %p144
      %p146 = scmp.ne.s32.totalorder %s132, %s133
      %p147 = scmp.eq.s32.totalorder %s22, 1
      %p148 = por %p146, %p147
      %p150 = scmp.ne.s32.totalorder %s133, %s149
      %p151 = scmp.eq.s32.totalorder %s22, 0
      %p152 = por %p150, %p151
      %p153 = scmp.le.s32.totalorder 1, %s16
      %p154 = scmp.lt.s32.totalorder %s16, 3
      %p155 = pnand %p153, %p154
      %p156 = pneg %p155
      // Predicated region
      $region9: #{tpu_custom_call.1} parent=5 // pred_check
        _
      $region10: #{tpu_custom_call.1} parent=5 // pred_check_branch
        %158 = sbr.rel (%p155) target = $region12
      $region11: #{tpu_custom_call.1} parent=5 // pred_region
        %s159 = ssub.s32 %s16, 1
        // Predicated region
        $region13: #{tpu_custom_call.1} parent=11 // pred_check
          %p160 = pneg %p91
        $region14: #{tpu_custom_call.1} parent=11 // pred_check_branch
          %162 = sbr.rel (%p160) target = $region16
        $region15: #{tpu_custom_call.1} parent=11 // pred_region
          %s163 = smul.u32 64, %s28
          %s164 = smul.u32 2, %s27
          %s166 = ssub.s32 16384, 16384
          %167 = vsyncadd [#allocation7], %s166
          %s168 = smul.addr %s163, 2
          %s169 = sadd.s32 %s164, %s168
          %s170 = smul.addr %s169, 128
          %s171 = scalar_lea.hbm %s1, %s170
          %s172 = sshll.u32 [#allocation6], 4
          %s173 = int_to_ptr.vmem [resolvable:$true] %s172
          %178 = dma.hbm_to_vmem [thread:$0]  %s171, 16384, %s173, [#allocation7], 256, 256, 16
        $region16: #{tpu_custom_call.1} parent=11 // pred_fallthru
          _
        // Predicated region
        $region17: #{tpu_custom_call.1} parent=11 // pred_check
          %p179 = pneg %p117
        $region18: #{tpu_custom_call.1} parent=11 // pred_check_branch
          %181 = sbr.rel (%p179) target = $region20
        $region19: #{tpu_custom_call.1} parent=11 // pred_region
          %s182 = smul.u32 2, %s27
          %p183 = scmp.lt.s32.totalorder %s182, 1
          %s184 = scalar_select %p183, %s182, 1
          %s185 = scalar_lea.vmem %s2, %s184
          %s186 = smul.u32 2, %s27
        $region20: #{tpu_custom_call.1} parent=11 // pred_fallthru
          _
      $region12: #{tpu_custom_call.1} parent=5 // pred_fallthru
        _
      %p187 = scmp.lt.s32.totalorder %s16, 2
      // Predicated region
      $region21: #{tpu_custom_call.1} parent=5 // pred_check
        %p188 = pneg %p187
      $region22: #{tpu_custom_call.1} parent=5 // pred_check_branch
        %190 = sbr.rel (%p188) target = $region24
      $region23: #{tpu_custom_call.1} parent=5 // pred_region
        // Predicated region
        $region25: #{tpu_custom_call.1} parent=23 // pred_check
          %p191 = pneg %p57
        $region26: #{tpu_custom_call.1} parent=23 // pred_check_branch
          %193 = sbr.rel (%p191) target = $region28
        $region27: #{tpu_custom_call.1} parent=23 // pred_region
          %s194 = sand.u32 %s47, 1
          %s195 = scalar_lea.sflag [#allocation4], %s194
          %s196 = sand.u32 %s47, 1
          %s197 = smul.addr %s196, 768
          %s198 = scalar_lea.vmem [#allocation3], %s197
          %s199 = smul.u32 24, %s23
          %s200 = smul.u32 4, %s25
          %s202 = ssub.s32 12288, 12288
          %203 = vsyncadd %s195, %s202
          %s204 = smul.addr %s199, 4
          %s205 = sadd.s32 %s200, %s204
          %s206 = smul.addr %s205, 128
          %s207 = scalar_lea.hbm %s0, %s206
          %s208 = sshll.u32 %s198, 4
          %s209 = int_to_ptr.vmem [resolvable:$true] %s208
          %214 = dma.hbm_to_vmem [thread:$0]  %s207, 12288, %s209, %s195, 512, 512, 32
        $region28: #{tpu_custom_call.1} parent=23 // pred_fallthru
          _
      $region24: #{tpu_custom_call.1} parent=5 // pred_fallthru
        _
      %p215 = scmp.le.s32.totalorder 1, %s16
      %p216 = scmp.lt.s32.totalorder %s16, 3
      %p217 = pnand %p215, %p216
      %p218 = pneg %p217
      // Predicated region
      $region29: #{tpu_custom_call.1} parent=5 // pred_check
        _
      $region30: #{tpu_custom_call.1} parent=5 // pred_check_branch
        %220 = sbr.rel (%p217) target = $region32
      $region31: #{tpu_custom_call.1} parent=5 // pred_region
        %s221 = ssub.s32 %s16, 1
        %s222 = sand.u32 %s50, 1
        %s223 = scalar_lea.sflag [#allocation4], %s222
        %s224 = sand.u32 %s50, 1
        %s225 = smul.addr %s224, 768
        %s226 = scalar_lea.vmem [#allocation3], %s225
        // Predicated region
        $region33: #{tpu_custom_call.1} parent=31 // pred_check
          %p227 = pneg %p63
        $region34: #{tpu_custom_call.1} parent=31 // pred_check_branch
          %229 = sbr.rel (%p227) target = $region36
        $region35: #{tpu_custom_call.1} parent=31 // pred_region
          %230 = dma.done %s223, 12288
        $region36: #{tpu_custom_call.1} parent=31 // pred_fallthru
          _
        // Predicated region
        $region37: #{tpu_custom_call.1} parent=31 // pred_check
          %p231 = pneg %p91
        $region38: #{tpu_custom_call.1} parent=31 // pred_check_branch
          %233 = sbr.rel (%p231) target = $region40
        $region39: #{tpu_custom_call.1} parent=31 // pred_region
          %234 = dma.done [#allocation7], 16384
        $region40: #{tpu_custom_call.1} parent=31 // pred_fallthru
          _
        %s235 = sand.u32 %s50, 1
        %s236 = scalar_lea.sflag [#allocation4], %s235
        %s237 = sand.u32 %s50, 1
        %s238 = smul.addr %s237, 768
        %s239 = scalar_lea.vmem [#allocation3], %s238
        %p240 = pneg %p63
        %p241 = pneg %p60
        %p242 = pneg %p91
        %p243 = pneg %p88
        %s244 = smul.u32 2, %s27
        %p245 = scmp.lt.s32.totalorder %s244, 1
        %s246 = scalar_select %p245, %s244, 1
        %s247 = scalar_lea.vmem %s2, %s246
        %p248 = pneg %p117
        %p249 = pneg %p114
        %p250 = pneg %p145
        %p251 = pneg %p142
        %s252 = sand.u32 %s132, 1
        %s253 = scalar_lea.sflag [#allocation5], %s252
        %s254 = sand.u32 %s132, 1
        %s255 = smul.addr %s254, 384
        %s256 = scalar_lea.vmem [#allocation8], %s255
        %s257 = smul.u32 24, %s26
        %s258 = smul.u32 4, %s28
        %s259 = smul.u32 64, %s28
        %s260 = smul.u32 2, %s27
        %s261 = smul.u32 2, %s27
        %p262 = scmp.lt.s32.totalorder %s261, 1
        %s263 = scalar_select %p262, %s261, 1
        %s264 = scalar_lea.vmem %s2, %s263
        %s265 = smul.u32 2, %s27
        %s266 = smul.u32 24, %s26
        %s267 = smul.u32 2, %s27
        %p268 = scmp.eq.s32.totalorder %s28, 0
        // Predicated region
        $region41: #{tpu_custom_call.1} parent=31 // pred_check
          %p269 = pneg %p268
        $region42: #{tpu_custom_call.1} parent=31 // pred_check_branch
          %271 = sbr.rel (%p269) target = $region44
        $region43: #{tpu_custom_call.1} parent=31 // pred_region
          %272 = vst [vmem:[#allocation2] sm:$0xff] 0.0
          %273 = vst [vmem:[#allocation2 + $0x8] sm:$0xff] 0.0
          %274 = vst [vmem:[#allocation2 + $0x10] sm:$0xff] 0.0
          %275 = vst [vmem:[#allocation2 + $0x18] sm:$0xff] 0.0
          %276 = vst [vmem:[#allocation2 + $0x20] sm:$0xff] 0.0
          %277 = vst [vmem:[#allocation2 + $0x28] sm:$0xff] 0.0
          %278 = vst [vmem:[#allocation2 + $0x30] sm:$0xff] 0.0
          %279 = vst [vmem:[#allocation2 + $0x38] sm:$0xff] 0.0
          %280 = vst [vmem:[#allocation2 + $0x40] sm:$0xff] 0.0
          %281 = vst [vmem:[#allocation2 + $0x48] sm:$0xff] 0.0
          %282 = vst [vmem:[#allocation2 + $0x50] sm:$0xff] 0.0
          %283 = vst [vmem:[#allocation2 + $0x58] sm:$0xff] 0.0
          %284 = vst [vmem:[#allocation2 + $0x60] sm:$0xff] 0.0
          %285 = vst [vmem:[#allocation2 + $0x68] sm:$0xff] 0.0
          %286 = vst [vmem:[#allocation2 + $0x70] sm:$0xff] 0.0
          %287 = vst [vmem:[#allocation2 + $0x78] sm:$0xff] 0.0
          %288 = vst [vmem:[#allocation2 + $0x80] sm:$0xff] 0.0
          %289 = vst [vmem:[#allocation2 + $0x88] sm:$0xff] 0.0
          %290 = vst [vmem:[#allocation2 + $0x90] sm:$0xff] 0.0
          %291 = vst [vmem:[#allocation2 + $0x98] sm:$0xff] 0.0
          %292 = vst [vmem:[#allocation2 + $0xa0] sm:$0xff] 0.0
          %293 = vst [vmem:[#allocation2 + $0xa8] sm:$0xff] 0.0
          %294 = vst [vmem:[#allocation2 + $0xb0] sm:$0xff] 0.0
          %295 = vst [vmem:[#allocation2 + $0xb8] sm:$0xff] 0.0
          %296 = vst [vmem:[#allocation2 + $0xc0] sm:$0xff] 0.0
          %297 = vst [vmem:[#allocation2 + $0xc8] sm:$0xff] 0.0
          %298 = vst [vmem:[#allocation2 + $0xd0] sm:$0xff] 0.0
          %299 = vst [vmem:[#allocation2 + $0xd8] sm:$0xff] 0.0
          %300 = vst [vmem:[#allocation2 + $0xe0] sm:$0xff] 0.0
          %301 = vst [vmem:[#allocation2 + $0xe8] sm:$0xff] 0.0
          %302 = vst [vmem:[#allocation2 + $0xf0] sm:$0xff] 0.0
          %303 = vst [vmem:[#allocation2 + $0xf8] sm:$0xff] 0.0
          %304 = vst [vmem:[#allocation2 + $0x100] sm:$0xff] 0.0
          %305 = vst [vmem:[#allocation2 + $0x108] sm:$0xff] 0.0
          %306 = vst [vmem:[#allocation2 + $0x110] sm:$0xff] 0.0
          %307 = vst [vmem:[#allocation2 + $0x118] sm:$0xff] 0.0
          %308 = vst [vmem:[#allocation2 + $0x120] sm:$0xff] 0.0
          %309 = vst [vmem:[#allocation2 + $0x128] sm:$0xff] 0.0
          %310 = vst [vmem:[#allocation2 + $0x130] sm:$0xff] 0.0
          %311 = vst [vmem:[#allocation2 + $0x138] sm:$0xff] 0.0
          %312 = vst [vmem:[#allocation2 + $0x140] sm:$0xff] 0.0
          %313 = vst [vmem:[#allocation2 + $0x148] sm:$0xff] 0.0
          %314 = vst [vmem:[#allocation2 + $0x150] sm:$0xff] 0.0
          %315 = vst [vmem:[#allocation2 + $0x158] sm:$0xff] 0.0
          %316 = vst [vmem:[#allocation2 + $0x160] sm:$0xff] 0.0
          %317 = vst [vmem:[#allocation2 + $0x168] sm:$0xff] 0.0
          %318 = vst [vmem:[#allocation2 + $0x170] sm:$0xff] 0.0
          %319 = vst [vmem:[#allocation2 + $0x178] sm:$0xff] 0.0
        $region44: #{tpu_custom_call.1} parent=31 // pred_fallthru
          _
        %v320 = vld [vmem:[#allocation2] sm:$0xff]
        %v321 = vld [vmem:[#allocation2 + $0x8] sm:$0xff]
        %v322 = vld [vmem:[#allocation2 + $0x10] sm:$0xff]
        %v323 = vld [vmem:[#allocation2 + $0x18] sm:$0xff]
        %v324 = vld [vmem:[#allocation2 + $0x20] sm:$0xff]
        %v325 = vld [vmem:[#allocation2 + $0x28] sm:$0xff]
        %v326 = vld [vmem:[#allocation2 + $0x30] sm:$0xff]
        %v327 = vld [vmem:[#allocation2 + $0x38] sm:$0xff]
        %v328 = vld [vmem:[#allocation2 + $0x40] sm:$0xff]
        %v329 = vld [vmem:[#allocation2 + $0x48] sm:$0xff]
        %v330 = vld [vmem:[#allocation2 + $0x50] sm:$0xff]
        %v331 = vld [vmem:[#allocation2 + $0x58] sm:$0xff]
        %v332 = vld [vmem:[#allocation2 + $0x60] sm:$0xff]
        %v333 = vld [vmem:[#allocation2 + $0x68] sm:$0xff]
        %v334 = vld [vmem:[#allocation2 + $0x70] sm:$0xff]
        %v335 = vld [vmem:[#allocation2 + $0x78] sm:$0xff]
        %v336 = vld [vmem:[#allocation2 + $0x80] sm:$0xff]
        %v337 = vld [vmem:[#allocation2 + $0x88] sm:$0xff]
        %v338 = vld [vmem:[#allocation2 + $0x90] sm:$0xff]
        %v339 = vld [vmem:[#allocation2 + $0x98] sm:$0xff]
        %v340 = vld [vmem:[#allocation2 + $0xa0] sm:$0xff]
        %v341 = vld [vmem:[#allocation2 + $0xa8] sm:$0xff]
        %v342 = vld [vmem:[#allocation2 + $0xb0] sm:$0xff]
        %v343 = vld [vmem:[#allocation2 + $0xb8] sm:$0xff]
        %v344 = vld [vmem:[#allocation2 + $0xc0] sm:$0xff]
        %v345 = vld [vmem:[#allocation2 + $0xc8] sm:$0xff]
        %v346 = vld [vmem:[#allocation2 + $0xd0] sm:$0xff]
        %v347 = vld [vmem:[#allocation2 + $0xd8] sm:$0xff]
        %v348 = vld [vmem:[#allocation2 + $0xe0] sm:$0xff]
        %v349 = vld [vmem:[#allocation2 + $0xe8] sm:$0xff]
        %v350 = vld [vmem:[#allocation2 + $0xf0] sm:$0xff]
        %v351 = vld [vmem:[#allocation2 + $0xf8] sm:$0xff]
        %v352 = vld [vmem:[#allocation2 + $0x100] sm:$0xff]
        %v353 = vld [vmem:[#allocation2 + $0x108] sm:$0xff]
        %v354 = vld [vmem:[#allocation2 + $0x110] sm:$0xff]
        %v355 = vld [vmem:[#allocation2 + $0x118] sm:$0xff]
        %v356 = vld [vmem:[#allocation2 + $0x120] sm:$0xff]
        %v357 = vld [vmem:[#allocation2 + $0x128] sm:$0xff]
        %v358 = vld [vmem:[#allocation2 + $0x130] sm:$0xff]
        %v359 = vld [vmem:[#allocation2 + $0x138] sm:$0xff]
        %v360 = vld [vmem:[#allocation2 + $0x140] sm:$0xff]
        %v361 = vld [vmem:[#allocation2 + $0x148] sm:$0xff]
        %v362 = vld [vmem:[#allocation2 + $0x150] sm:$0xff]
        %v363 = vld [vmem:[#allocation2 + $0x158] sm:$0xff]
        %v364 = vld [vmem:[#allocation2 + $0x160] sm:$0xff]
        %v365 = vld [vmem:[#allocation2 + $0x168] sm:$0xff]
        %v366 = vld [vmem:[#allocation2 + $0x170] sm:$0xff]
        %v367 = vld [vmem:[#allocation2 + $0x178] sm:$0xff]
        %v368 = vld [vmem:[%s226] sm:$0xff]
        %v369 = vld [vmem:[%s226 + $0x8] sm:$0xff]
        %v370 = vld [vmem:[%s226 + $0x10] sm:$0xff]
        %v371 = vld [vmem:[%s226 + $0x18] sm:$0xff]
        %v372 = vld [vmem:[%s226 + $0x20] sm:$0xff]
        %v373 = vld [vmem:[%s226 + $0x28] sm:$0xff]
        %v374 = vld [vmem:[%s226 + $0x30] sm:$0xff]
        %v375 = vld [vmem:[%s226 + $0x38] sm:$0xff]
        %v376 = vld [vmem:[%s226 + $0x40] sm:$0xff]
        %v377 = vld [vmem:[%s226 + $0x48] sm:$0xff]
        %v378 = vld [vmem:[%s226 + $0x50] sm:$0xff]
        %v379 = vld [vmem:[%s226 + $0x58] sm:$0xff]
        %v380 = vld [vmem:[%s226 + $0x60] sm:$0xff]
        %v381 = vld [vmem:[%s226 + $0x68] sm:$0xff]
        %v382 = vld [vmem:[%s226 + $0x70] sm:$0xff]
        %v383 = vld [vmem:[%s226 + $0x78] sm:$0xff]
        %v384 = vld [vmem:[%s226 + $0x80] sm:$0xff]
        %v385 = vld [vmem:[%s226 + $0x88] sm:$0xff]
        %v386 = vld [vmem:[%s226 + $0x90] sm:$0xff]
        %v387 = vld [vmem:[%s226 + $0x98] sm:$0xff]
        %v388 = vld [vmem:[%s226 + $0xa0] sm:$0xff]
        %v389 = vld [vmem:[%s226 + $0xa8] sm:$0xff]
        %v390 = vld [vmem:[%s226 + $0xb0] sm:$0xff]
        %v391 = vld [vmem:[%s226 + $0xb8] sm:$0xff]
        %v392 = vld [vmem:[%s226 + $0xc0] sm:$0xff]
        %v393 = vld [vmem:[%s226 + $0xc8] sm:$0xff]
        %v394 = vld [vmem:[%s226 + $0xd0] sm:$0xff]
        %v395 = vld [vmem:[%s226 + $0xd8] sm:$0xff]
        %v396 = vld [vmem:[%s226 + $0xe0] sm:$0xff]
        %v397 = vld [vmem:[%s226 + $0xe8] sm:$0xff]
        %v398 = vld [vmem:[%s226 + $0xf0] sm:$0xff]
        %v399 = vld [vmem:[%s226 + $0xf8] sm:$0xff]
        %v400 = vld [vmem:[%s226 + $0x100] sm:$0xff]
        %v401 = vld [vmem:[%s226 + $0x108] sm:$0xff]
        %v402 = vld [vmem:[%s226 + $0x110] sm:$0xff]
        %v403 = vld [vmem:[%s226 + $0x118] sm:$0xff]
        %v404 = vld [vmem:[%s226 + $0x120] sm:$0xff]
        %v405 = vld [vmem:[%s226 + $0x128] sm:$0xff]
        %v406 = vld [vmem:[%s226 + $0x130] sm:$0xff]
        %v407 = vld [vmem:[%s226 + $0x138] sm:$0xff]
        %v408 = vld [vmem:[%s226 + $0x140] sm:$0xff]
        %v409 = vld [vmem:[%s226 + $0x148] sm:$0xff]
        %v410 = vld [vmem:[%s226 + $0x150] sm:$0xff]
        %v411 = vld [vmem:[%s226 + $0x158] sm:$0xff]
        %v412 = vld [vmem:[%s226 + $0x160] sm:$0xff]
        %v413 = vld [vmem:[%s226 + $0x168] sm:$0xff]
        %v414 = vld [vmem:[%s226 + $0x170] sm:$0xff]
        %v415 = vld [vmem:[%s226 + $0x178] sm:$0xff]
        %v416 = vld [vmem:[%s226 + $0x180] sm:$0xff]
        %v417 = vld [vmem:[%s226 + $0x188] sm:$0xff]
        %v418 = vld [vmem:[%s226 + $0x190] sm:$0xff]
        %v419 = vld [vmem:[%s226 + $0x198] sm:$0xff]
        %v420 = vld [vmem:[%s226 + $0x1a0] sm:$0xff]
        %v421 = vld [vmem:[%s226 + $0x1a8] sm:$0xff]
        %v422 = vld [vmem:[%s226 + $0x1b0] sm:$0xff]
        %v423 = vld [vmem:[%s226 + $0x1b8] sm:$0xff]
        %v424 = vld [vmem:[%s226 + $0x1c0] sm:$0xff]
        %v425 = vld [vmem:[%s226 + $0x1c8] sm:$0xff]
        %v426 = vld [vmem:[%s226 + $0x1d0] sm:$0xff]
        %v427 = vld [vmem:[%s226 + $0x1d8] sm:$0xff]
        %v428 = vld [vmem:[%s226 + $0x1e0] sm:$0xff]
        %v429 = vld [vmem:[%s226 + $0x1e8] sm:$0xff]
        %v430 = vld [vmem:[%s226 + $0x1f0] sm:$0xff]
        %v431 = vld [vmem:[%s226 + $0x1f8] sm:$0xff]
        %v432 = vld [vmem:[%s226 + $0x200] sm:$0xff]
        %v433 = vld [vmem:[%s226 + $0x208] sm:$0xff]
        %v434 = vld [vmem:[%s226 + $0x210] sm:$0xff]
        %v435 = vld [vmem:[%s226 + $0x218] sm:$0xff]
        %v436 = vld [vmem:[%s226 + $0x220] sm:$0xff]
        %v437 = vld [vmem:[%s226 + $0x228] sm:$0xff]
        %v438 = vld [vmem:[%s226 + $0x230] sm:$0xff]
        %v439 = vld [vmem:[%s226 + $0x238] sm:$0xff]
        %v440 = vld [vmem:[%s226 + $0x240] sm:$0xff]
        %v441 = vld [vmem:[%s226 + $0x248] sm:$0xff]
        %v442 = vld [vmem:[%s226 + $0x250] sm:$0xff]
        %v443 = vld [vmem:[%s226 + $0x258] sm:$0xff]
        %v444 = vld [vmem:[%s226 + $0x260] sm:$0xff]
        %v445 = vld [vmem:[%s226 + $0x268] sm:$0xff]
        %v446 = vld [vmem:[%s226 + $0x270] sm:$0xff]
        %v447 = vld [vmem:[%s226 + $0x278] sm:$0xff]
        %v448 = vld [vmem:[%s226 + $0x280] sm:$0xff]
        %v449 = vld [vmem:[%s226 + $0x288] sm:$0xff]
        %v450 = vld [vmem:[%s226 + $0x290] sm:$0xff]
        %v451 = vld [vmem:[%s226 + $0x298] sm:$0xff]
        %v452 = vld [vmem:[%s226 + $0x2a0] sm:$0xff]
        %v453 = vld [vmem:[%s226 + $0x2a8] sm:$0xff]
        %v454 = vld [vmem:[%s226 + $0x2b0] sm:$0xff]
        %v455 = vld [vmem:[%s226 + $0x2b8] sm:$0xff]
        %v456 = vld [vmem:[%s226 + $0x2c0] sm:$0xff]
        %v457 = vld [vmem:[%s226 + $0x2c8] sm:$0xff]
        %v458 = vld [vmem:[%s226 + $0x2d0] sm:$0xff]
        %v459 = vld [vmem:[%s226 + $0x2d8] sm:$0xff]
        %v460 = vld [vmem:[%s226 + $0x2e0] sm:$0xff]
        %v461 = vld [vmem:[%s226 + $0x2e8] sm:$0xff]
        %v462 = vld [vmem:[%s226 + $0x2f0] sm:$0xff]
        %v463 = vld [vmem:[%s226 + $0x2f8] sm:$0xff]
        %v464 = vld [vmem:[#allocation6] sm:$0xff]
        %v465 = vld [vmem:[#allocation6 + $0x8] sm:$0xff]
        %v466 = vld [vmem:[#allocation6 + $0x10] sm:$0xff]
        %v467 = vld [vmem:[#allocation6 + $0x18] sm:$0xff]
        %v468 = vld [vmem:[#allocation6 + $0x20] sm:$0xff]
        %v469 = vld [vmem:[#allocation6 + $0x28] sm:$0xff]
        %v470 = vld [vmem:[#allocation6 + $0x30] sm:$0xff]
        %v471 = vld [vmem:[#allocation6 + $0x38] sm:$0xff]
        %v472 = vld [vmem:[#allocation6 + $0x40] sm:$0xff]
        %v473 = vld [vmem:[#allocation6 + $0x48] sm:$0xff]
        %v474 = vld [vmem:[#allocation6 + $0x50] sm:$0xff]
        %v475 = vld [vmem:[#allocation6 + $0x58] sm:$0xff]
        %v476 = vld [vmem:[#allocation6 + $0x60] sm:$0xff]
        %v477 = vld [vmem:[#allocation6 + $0x68] sm:$0xff]
        %v478 = vld [vmem:[#allocation6 + $0x70] sm:$0xff]
        %v479 = vld [vmem:[#allocation6 + $0x78] sm:$0xff]
        %v480 = vld [vmem:[#allocation6 + $0x80] sm:$0xff]
        %v481 = vld [vmem:[#allocation6 + $0x88] sm:$0xff]
        %v482 = vld [vmem:[#allocation6 + $0x90] sm:$0xff]
        %v483 = vld [vmem:[#allocation6 + $0x98] sm:$0xff]
        %v484 = vld [vmem:[#allocation6 + $0xa0] sm:$0xff]
        %v485 = vld [vmem:[#allocation6 + $0xa8] sm:$0xff]
        %v486 = vld [vmem:[#allocation6 + $0xb0] sm:$0xff]
        %v487 = vld [vmem:[#allocation6 + $0xb8] sm:$0xff]
        %v488 = vld [vmem:[#allocation6 + $0xc0] sm:$0xff]
        %v489 = vld [vmem:[#allocation6 + $0xc8] sm:$0xff]
        %v490 = vld [vmem:[#allocation6 + $0xd0] sm:$0xff]
        %v491 = vld [vmem:[#allocation6 + $0xd8] sm:$0xff]
        %v492 = vld [vmem:[#allocation6 + $0xe0] sm:$0xff]
        %v493 = vld [vmem:[#allocation6 + $0xe8] sm:$0xff]
        %v494 = vld [vmem:[#allocation6 + $0xf0] sm:$0xff]
        %v495 = vld [vmem:[#allocation6 + $0xf8] sm:$0xff]
        %v496 = vld [vmem:[#allocation6 + $0x100] sm:$0xff]
        %v497 = vld [vmem:[#allocation6 + $0x108] sm:$0xff]
        %v498 = vld [vmem:[#allocation6 + $0x110] sm:$0xff]
        %v499 = vld [vmem:[#allocation6 + $0x118] sm:$0xff]
        %v500 = vld [vmem:[#allocation6 + $0x120] sm:$0xff]
        %v501 = vld [vmem:[#allocation6 + $0x128] sm:$0xff]
        %v502 = vld [vmem:[#allocation6 + $0x130] sm:$0xff]
        %v503 = vld [vmem:[#allocation6 + $0x138] sm:$0xff]
        %v504 = vld [vmem:[#allocation6 + $0x140] sm:$0xff]
        %v505 = vld [vmem:[#allocation6 + $0x148] sm:$0xff]
        %v506 = vld [vmem:[#allocation6 + $0x150] sm:$0xff]
        %v507 = vld [vmem:[#allocation6 + $0x158] sm:$0xff]
        %v508 = vld [vmem:[#allocation6 + $0x160] sm:$0xff]
        %v509 = vld [vmem:[#allocation6 + $0x168] sm:$0xff]
        %v510 = vld [vmem:[#allocation6 + $0x170] sm:$0xff]
        %v511 = vld [vmem:[#allocation6 + $0x178] sm:$0xff]
        %v512 = vld [vmem:[#allocation6 + $0x180] sm:$0xff]
        %v513 = vld [vmem:[#allocation6 + $0x188] sm:$0xff]
        %v514 = vld [vmem:[#allocation6 + $0x190] sm:$0xff]
        %v515 = vld [vmem:[#allocation6 + $0x198] sm:$0xff]
        %v516 = vld [vmem:[#allocation6 + $0x1a0] sm:$0xff]
        %v517 = vld [vmem:[#allocation6 + $0x1a8] sm:$0xff]
        %v518 = vld [vmem:[#allocation6 + $0x1b0] sm:$0xff]
        %v519 = vld [vmem:[#allocation6 + $0x1b8] sm:$0xff]
        %v520 = vld [vmem:[#allocation6 + $0x1c0] sm:$0xff]
        %v521 = vld [vmem:[#allocation6 + $0x1c8] sm:$0xff]
        %v522 = vld [vmem:[#allocation6 + $0x1d0] sm:$0xff]
        %v523 = vld [vmem:[#allocation6 + $0x1d8] sm:$0xff]
        %v524 = vld [vmem:[#allocation6 + $0x1e0] sm:$0xff]
        %v525 = vld [vmem:[#allocation6 + $0x1e8] sm:$0xff]
        %v526 = vld [vmem:[#allocation6 + $0x1f0] sm:$0xff]
        %v527 = vld [vmem:[#allocation6 + $0x1f8] sm:$0xff]
        %v528 = vld [vmem:[#allocation6 + $0x200] sm:$0xff]
        %v529 = vld [vmem:[#allocation6 + $0x208] sm:$0xff]
        %v530 = vld [vmem:[#allocation6 + $0x210] sm:$0xff]
        %v531 = vld [vmem:[#allocation6 + $0x218] sm:$0xff]
        %v532 = vld [vmem:[#allocation6 + $0x220] sm:$0xff]
        %v533 = vld [vmem:[#allocation6 + $0x228] sm:$0xff]
        %v534 = vld [vmem:[#allocation6 + $0x230] sm:$0xff]
        %v535 = vld [vmem:[#allocation6 + $0x238] sm:$0xff]
        %v536 = vld [vmem:[#allocation6 + $0x240] sm:$0xff]
        %v537 = vld [vmem:[#allocation6 + $0x248] sm:$0xff]
        %v538 = vld [vmem:[#allocation6 + $0x250] sm:$0xff]
        %v539 = vld [vmem:[#allocation6 + $0x258] sm:$0xff]
        %v540 = vld [vmem:[#allocation6 + $0x260] sm:$0xff]
        %v541 = vld [vmem:[#allocation6 + $0x268] sm:$0xff]
        %v542 = vld [vmem:[#allocation6 + $0x270] sm:$0xff]
        %v543 = vld [vmem:[#allocation6 + $0x278] sm:$0xff]
        %v544 = vld [vmem:[#allocation6 + $0x280] sm:$0xff]
        %v545 = vld [vmem:[#allocation6 + $0x288] sm:$0xff]
        %v546 = vld [vmem:[#allocation6 + $0x290] sm:$0xff]
        %v547 = vld [vmem:[#allocation6 + $0x298] sm:$0xff]
        %v548 = vld [vmem:[#allocation6 + $0x2a0] sm:$0xff]
        %v549 = vld [vmem:[#allocation6 + $0x2a8] sm:$0xff]
        %v550 = vld [vmem:[#allocation6 + $0x2b0] sm:$0xff]
        %v551 = vld [vmem:[#allocation6 + $0x2b8] sm:$0xff]
        %v552 = vld [vmem:[#allocation6 + $0x2c0] sm:$0xff]
        %v553 = vld [vmem:[#allocation6 + $0x2c8] sm:$0xff]
        %v554 = vld [vmem:[#allocation6 + $0x2d0] sm:$0xff]
        %v555 = vld [vmem:[#allocation6 + $0x2d8] sm:$0xff]
        %v556 = vld [vmem:[#allocation6 + $0x2e0] sm:$0xff]
        %v557 = vld [vmem:[#allocation6 + $0x2e8] sm:$0xff]
        %v558 = vld [vmem:[#allocation6 + $0x2f0] sm:$0xff]
        %v559 = vld [vmem:[#allocation6 + $0x2f8] sm:$0xff]
        %v560 = vld [vmem:[#allocation6 + $0x300] sm:$0xff]
        %v561 = vld [vmem:[#allocation6 + $0x308] sm:$0xff]
        %v562 = vld [vmem:[#allocation6 + $0x310] sm:$0xff]
        %v563 = vld [vmem:[#allocation6 + $0x318] sm:$0xff]
        %v564 = vld [vmem:[#allocation6 + $0x320] sm:$0xff]
        %v565 = vld [vmem:[#allocation6 + $0x328] sm:$0xff]
        %v566 = vld [vmem:[#allocation6 + $0x330] sm:$0xff]
        %v567 = vld [vmem:[#allocation6 + $0x338] sm:$0xff]
        %v568 = vld [vmem:[#allocation6 + $0x340] sm:$0xff]
        %v569 = vld [vmem:[#allocation6 + $0x348] sm:$0xff]
        %v570 = vld [vmem:[#allocation6 + $0x350] sm:$0xff]
        %v571 = vld [vmem:[#allocation6 + $0x358] sm:$0xff]
        %v572 = vld [vmem:[#allocation6 + $0x360] sm:$0xff]
        %v573 = vld [vmem:[#allocation6 + $0x368] sm:$0xff]
        %v574 = vld [vmem:[#allocation6 + $0x370] sm:$0xff]
        %v575 = vld [vmem:[#allocation6 + $0x378] sm:$0xff]
        %v576 = vld [vmem:[#allocation6 + $0x380] sm:$0xff]
        %v577 = vld [vmem:[#allocation6 + $0x388] sm:$0xff]
        %v578 = vld [vmem:[#allocation6 + $0x390] sm:$0xff]
        %v579 = vld [vmem:[#allocation6 + $0x398] sm:$0xff]
        %v580 = vld [vmem:[#allocation6 + $0x3a0] sm:$0xff]
        %v581 = vld [vmem:[#allocation6 + $0x3a8] sm:$0xff]
        %v582 = vld [vmem:[#allocation6 + $0x3b0] sm:$0xff]
        %v583 = vld [vmem:[#allocation6 + $0x3b8] sm:$0xff]
        %v584 = vld [vmem:[#allocation6 + $0x3c0] sm:$0xff]
        %v585 = vld [vmem:[#allocation6 + $0x3c8] sm:$0xff]
        %v586 = vld [vmem:[#allocation6 + $0x3d0] sm:$0xff]
        %v587 = vld [vmem:[#allocation6 + $0x3d8] sm:$0xff]
        %v588 = vld [vmem:[#allocation6 + $0x3e0] sm:$0xff]
        %v589 = vld [vmem:[#allocation6 + $0x3e8] sm:$0xff]
        %v590 = vld [vmem:[#allocation6 + $0x3f0] sm:$0xff]
        %v591 = vld [vmem:[#allocation6 + $0x3f8] sm:$0xff]
        %592 = vmatprep.subr.mxu0 %v465
        %593 = vmatpush1.msra.mxu0 %v464
        %594 = vmatprep.subr.mxu0 %v467
        %595 = vmatpush1.msra.mxu0 %v466
        %596 = vmatprep.subr.mxu0 %v469
        %597 = vmatpush1.msra.mxu0 %v468
        %598 = vmatprep.subr.mxu0 %v471
        %599 = vmatpush1.msra.mxu0 %v470
        %600 = vmatprep.subr.mxu0 %v473
        %601 = vmatpush1.msra.mxu0 %v472
        %602 = vmatprep.subr.mxu0 %v475
        %603 = vmatpush1.msra.mxu0 %v474
        %604 = vmatprep.subr.mxu0 %v477
        %605 = vmatpush1.msra.mxu0 %v476
        %606 = vmatprep.subr.mxu0 %v479
        %607 = vmatpush1.msra.mxu0 %v478
        %608 = vmatprep.subr.mxu0 %v481
        %609 = vmatpush1.msra.mxu0 %v480
        %610 = vmatprep.subr.mxu0 %v483
        %611 = vmatpush1.msra.mxu0 %v482
        %612 = vmatprep.subr.mxu0 %v485
        %613 = vmatpush1.msra.mxu0 %v484
        %614 = vmatprep.subr.mxu0 %v487
        %615 = vmatpush1.msra.mxu0 %v486
        %616 = vmatprep.subr.mxu0 %v489
        %617 = vmatpush1.msra.mxu0 %v488
        %618 = vmatprep.subr.mxu0 %v491
        %619 = vmatpush1.msra.mxu0 %v490
        %620 = vmatprep.subr.mxu0 %v493
        %621 = vmatpush1.msra.mxu0 %v492
        %622 = vmatprep.subr.mxu0 %v495
        %623 = vmatpush1.msra.mxu0 %v494
        %624 = vmatprep.subr.mxu0 %v497
        %625 = vmatpush1.msra.mxu0 %v496
        %626 = vmatprep.subr.mxu0 %v499
        %627 = vmatpush1.msra.mxu0 %v498
        %628 = vmatprep.subr.mxu0 %v501
        %629 = vmatpush1.msra.mxu0 %v500
        %630 = vmatprep.subr.mxu0 %v503
        %631 = vmatpush1.msra.mxu0 %v502
        %632 = vmatprep.subr.mxu0 %v505
        %633 = vmatpush1.msra.mxu0 %v504
        %634 = vmatprep.subr.mxu0 %v507
        %635 = vmatpush1.msra.mxu0 %v506
        %636 = vmatprep.subr.mxu0 %v509
        %637 = vmatpush1.msra.mxu0 %v508
        %638 = vmatprep.subr.mxu0 %v511
        %639 = vmatpush1.msra.mxu0 %v510
        %640 = vmatprep.subr.mxu0 %v513
        %641 = vmatpush1.msra.mxu0 %v512
        %642 = vmatprep.subr.mxu0 %v515
        %643 = vmatpush1.msra.mxu0 %v514
        %644 = vmatprep.subr.mxu0 %v517
        %645 = vmatpush1.msra.mxu0 %v516
        %646 = vmatprep.subr.mxu0 %v519
        %647 = vmatpush1.msra.mxu0 %v518
        %648 = vmatprep.subr.mxu0 %v521
        %649 = vmatpush1.msra.mxu0 %v520
        %650 = vmatprep.subr.mxu0 %v523
        %651 = vmatpush1.msra.mxu0 %v522
        %652 = vmatprep.subr.mxu0 %v525
        %653 = vmatpush1.msra.mxu0 %v524
        %654 = vmatprep.subr.mxu0 %v527
        %655 = vmatpush1.msra.mxu0 %v526
        %656 = vmatprep.mubr.f32.mxu0 %v369
        %657 = vmatmul.mubr.f32.gmra.mrb[0].mxu0 %v368
        %v658 = vpop.f32.mrb[0].mxu0
        %v659 = vadd.f32 0.0, %v658
        %v660 = vpop.f32.mrb[0].mxu0
        %v661 = vadd.f32 0.0, %v660
        %662 = vmatprep.mubr.f32.mxu0 %v373
        %663 = vmatmul.mubr.f32.gmra.mrb[0].mxu0 %v372
        %v664 = vpop.f32.mrb[0].mxu0
        %v665 = vadd.f32 0.0, %v664
        %v666 = vpop.f32.mrb[0].mxu0
        %v667 = vadd.f32 0.0, %v666
        %668 = vmatprep.mubr.f32.mxu0 %v377
        %669 = vmatmul.mubr.f32.gmra.mrb[0].mxu0 %v376
        %v670 = vpop.f32.mrb[0].mxu0
        %v671 = vadd.f32 0.0, %v670
        %v672 = vpop.f32.mrb[0].mxu0
        %v673 = vadd.f32 0.0, %v672
        %674 = vmatprep.mubr.f32.mxu0 %v381
        %675 = vmatmul.mubr.f32.gmra.mrb[0].mxu0 %v380
        %v676 = vpop.f32.mrb[0].mxu0
        %v677 = vadd.f32 0.0, %v676
        %v678 = vpop.f32.mrb[0].mxu0
        %v679 = vadd.f32 0.0, %v678
        %680 = vmatprep.mubr.f32.mxu0 %v385
        %681 = vmatmul.mubr.f32.gmra.mrb[0].mxu0 %v384
        %v682 = vpop.f32.mrb[0].mxu0
        %v683 = vadd.f32 0.0, %v682
        %v684 = vpop.f32.mrb[0].mxu0
        %v685 = vadd.f32 0.0, %v684
        %686 = vmatprep.mubr.f32.mxu0 %v389
        %687 = vmatmul.mubr.f32.gmra.mrb[0].mxu0 %v388
        %v688 = vpop.f32.mrb[0].mxu0
        %v689 = vadd.f32 0.0, %v688
        %v690 = vpop.f32.mrb[0].mxu0
        %v691 = vadd.f32 0.0, %v690
        %692 = vmatprep.mubr.f32.mxu0 %v393
        %693 = vmatmul.mubr.f32.gmra.mrb[0].mxu0 %v392
        %v694 = vpop.f32.mrb[0].mxu0
        %v695 = vadd.f32 0.0, %v694
        %v696 = vpop.f32.mrb[0].mxu0
        %v697 = vadd.f32 0.0, %v696
        %698 = vmatprep.mubr.f32.mxu0 %v397
        %699 = vmatmul.mubr.f32.gmra.mrb[0].mxu0 %v396
        %v700 = vpop.f32.mrb[0].mxu0
        %v701 = vadd.f32 0.0, %v700
        %v702 = vpop.f32.mrb[0].mxu0
        %v703 = vadd.f32 0.0, %v702
        %704 = vmatprep.mubr.f32.mxu0 %v401
        %705 = vmatmul.mubr.f32.gmra.mrb[0].mxu0 %v400
        %v706 = vpop.f32.mrb[0].mxu0
        %v707 = vadd.f32 0.0, %v706
        %v708 = vpop.f32.mrb[0].mxu0
        %v709 = vadd.f32 0.0, %v708
        %710 = vmatprep.mubr.f32.mxu0 %v405
        %711 = vmatmul.mubr.f32.gmra.mrb[0].mxu0 %v404
        %v712 = vpop.f32.mrb[0].mxu0
        %v713 = vadd.f32 0.0, %v712
        %v714 = vpop.f32.mrb[0].mxu0
        %v715 = vadd.f32 0.0, %v714
        %716 = vmatprep.mubr.f32.mxu0 %v409
        %717 = vmatmul.mubr.f32.gmra.mrb[0].mxu0 %v408
        %v718 = vpop.f32.mrb[0].mxu0
        %v719 = vadd.f32 0.0, %v718
        %v720 = vpop.f32.mrb[0].mxu0
        %v721 = vadd.f32 0.0, %v720
        %722 = vmatprep.mubr.f32.mxu0 %v413
        %723 = vmatmul.mubr.f32.gmra.mrb[0].mxu0 %v412
        %v724 = vpop.f32.mrb[0].mxu0
        %v725 = vadd.f32 0.0, %v724
        %v726 = vpop.f32.mrb[0].mxu0
        %v727 = vadd.f32 0.0, %v726
        %728 = vmatprep.mubr.f32.mxu0 %v417
        %729 = vmatmul.mubr.f32.gmra.mrb[0].mxu0 %v416
        %v730 = vpop.f32.mrb[0].mxu0
        %v731 = vadd.f32 0.0, %v730
        %v732 = vpop.f32.mrb[0].mxu0
        %v733 = vadd.f32 0.0, %v732
        %734 = vmatprep.mubr.f32.mxu0 %v421
        %735 = vmatmul.mubr.f32.gmra.mrb[0].mxu0 %v420
        %v736 = vpop.f32.mrb[0].mxu0
        %v737 = vadd.f32 0.0, %v736
        %v738 = vpop.f32.mrb[0].mxu0
        %v739 = vadd.f32 0.0, %v738
        %740 = vmatprep.mubr.f32.mxu0 %v425
        %741 = vmatmul.mubr.f32.gmra.mrb[0].mxu0 %v424
        %v742 = vpop.f32.mrb[0].mxu0
        %v743 = vadd.f32 0.0, %v742
        %v744 = vpop.f32.mrb[0].mxu0
        %v745 = vadd.f32 0.0, %v744
        %746 = vmatprep.mubr.f32.mxu0 %v429
        %747 = vmatmul.mubr.f32.gmra.mrb[0].mxu0 %v428
        %v748 = vpop.f32.mrb[0].mxu0
        %v749 = vadd.f32 0.0, %v748
        %v750 = vpop.f32.mrb[0].mxu0
        %v751 = vadd.f32 0.0, %v750
        %752 = vmatprep.mubr.f32.mxu0 %v433
        %753 = vmatmul.mubr.f32.gmra.mrb[0].mxu0 %v432
        %v754 = vpop.f32.mrb[0].mxu0
        %v755 = vadd.f32 0.0, %v754
        %v756 = vpop.f32.mrb[0].mxu0
        %v757 = vadd.f32 0.0, %v756
        %758 = vmatprep.mubr.f32.mxu0 %v437
        %759 = vmatmul.mubr.f32.gmra.mrb[0].mxu0 %v436
        %v760 = vpop.f32.mrb[0].mxu0
        %v761 = vadd.f32 0.0, %v760
        %v762 = vpop.f32.mrb[0].mxu0
        %v763 = vadd.f32 0.0, %v762
        %764 = vmatprep.mubr.f32.mxu0 %v441
        %765 = vmatmul.mubr.f32.gmra.mrb[0].mxu0 %v440
        %v766 = vpop.f32.mrb[0].mxu0
        %v767 = vadd.f32 0.0, %v766
        %v768 = vpop.f32.mrb[0].mxu0
        %v769 = vadd.f32 0.0, %v768
        %770 = vmatprep.mubr.f32.mxu0 %v445
        %771 = vmatmul.mubr.f32.gmra.mrb[0].mxu0 %v444
        %v772 = vpop.f32.mrb[0].mxu0
        %v773 = vadd.f32 0.0, %v772
        %v774 = vpop.f32.mrb[0].mxu0
        %v775 = vadd.f32 0.0, %v774
        %776 = vmatprep.mubr.f32.mxu0 %v449
        %777 = vmatmul.mubr.f32.gmra.mrb[0].mxu0 %v448
        %v778 = vpop.f32.mrb[0].mxu0
        %v779 = vadd.f32 0.0, %v778
        %v780 = vpop.f32.mrb[0].mxu0
        %v781 = vadd.f32 0.0, %v780
        %782 = vmatprep.mubr.f32.mxu0 %v453
        %783 = vmatmul.mubr.f32.gmra.mrb[0].mxu0 %v452
        %v784 = vpop.f32.mrb[0].mxu0
        %v785 = vadd.f32 0.0, %v784
        %v786 = vpop.f32.mrb[0].mxu0
        %v787 = vadd.f32 0.0, %v786
        %788 = vmatprep.mubr.f32.mxu0 %v457
        %789 = vmatmul.mubr.f32.gmra.mrb[0].mxu0 %v456
        %v790 = vpop.f32.mrb[0].mxu0
        %v791 = vadd.f32 0.0, %v790
        %v792 = vpop.f32.mrb[0].mxu0
        %v793 = vadd.f32 0.0, %v792
        %794 = vmatprep.mubr.f32.mxu0 %v461
        %795 = vmatmul.mubr.f32.gmra.mrb[0].mxu0 %v460
        %v796 = vpop.f32.mrb[0].mxu0
        %v797 = vadd.f32 0.0, %v796
        %v798 = vpop.f32.mrb[0].mxu0
        %v799 = vadd.f32 0.0, %v798
        %800 = vdwg.mxu0
        %801 = vmatprep.subr.mxu0 %v529
        %802 = vmatpush1.msra.mxu0 %v528
        %803 = vmatprep.subr.mxu0 %v531
        %804 = vmatpush1.msra.mxu0 %v530
        %805 = vmatprep.subr.mxu0 %v533
        %806 = vmatpush1.msra.mxu0 %v532
        %807 = vmatprep.subr.mxu0 %v535
        %808 = vmatpush1.msra.mxu0 %v534
        %809 = vmatprep.subr.mxu0 %v537
        %810 = vmatpush1.msra.mxu0 %v536
        %811 = vmatprep.subr.mxu0 %v539
        %812 = vmatpush1.msra.mxu0 %v538
        %813 = vmatprep.subr.mxu0 %v541
        %814 = vmatpush1.msra.mxu0 %v540
        %815 = vmatprep.subr.mxu0 %v543
        %816 = vmatpush1.msra.mxu0 %v542
        %817 = vmatprep.subr.mxu0 %v545
        %818 = vmatpush1.msra.mxu0 %v544
        %819 = vmatprep.subr.mxu0 %v547
        %820 = vmatpush1.msra.mxu0 %v546
        %821 = vmatprep.subr.mxu0 %v549
        %822 = vmatpush1.msra.mxu0 %v548
        %823 = vmatprep.subr.mxu0 %v551
        %824 = vmatpush1.msra.mxu0 %v550
        %825 = vmatprep.subr.mxu0 %v553
        %826 = vmatpush1.msra.mxu0 %v552
        %827 = vmatprep.subr.mxu0 %v555
        %828 = vmatpush1.msra.mxu0 %v554
        %829 = vmatprep.subr.mxu0 %v557
        %830 = vmatpush1.msra.mxu0 %v556
        %831 = vmatprep.subr.mxu0 %v559
        %832 = vmatpush1.msra.mxu0 %v558
        %833 = vmatprep.subr.mxu0 %v561
        %834 = vmatpush1.msra.mxu0 %v560
        %835 = vmatprep.subr.mxu0 %v563
        %836 = vmatpush1.msra.mxu0 %v562
        %837 = vmatprep.subr.mxu0 %v565
        %838 = vmatpush1.msra.mxu0 %v564
        %839 = vmatprep.subr.mxu0 %v567
        %840 = vmatpush1.msra.mxu0 %v566
        %841 = vmatprep.subr.mxu0 %v569
        %842 = vmatpush1.msra.mxu0 %v568
        %843 = vmatprep.subr.mxu0 %v571
        %844 = vmatpush1.msra.mxu0 %v570
        %845 = vmatprep.subr.mxu0 %v573
        %846 = vmatpush1.msra.mxu0 %v572
        %847 = vmatprep.subr.mxu0 %v575
        %848 = vmatpush1.msra.mxu0 %v574
        %849 = vmatprep.subr.mxu0 %v577
        %850 = vmatpush1.msra.mxu0 %v576
        %851 = vmatprep.subr.mxu0 %v579
        %852 = vmatpush1.msra.mxu0 %v578
        %853 = vmatprep.subr.mxu0 %v581
        %854 = vmatpush1.msra.mxu0 %v580
        %855 = vmatprep.subr.mxu0 %v583
        %856 = vmatpush1.msra.mxu0 %v582
        %857 = vmatprep.subr.mxu0 %v585
        %858 = vmatpush1.msra.mxu0 %v584
        %859 = vmatprep.subr.mxu0 %v587
        %860 = vmatpush1.msra.mxu0 %v586
        %861 = vmatprep.subr.mxu0 %v589
        %862 = vmatpush1.msra.mxu0 %v588
        %863 = vmatprep.subr.mxu0 %v591
        %864 = vmatpush1.msra.mxu0 %v590
        %865 = vmatprep.mubr.f32.mxu0 %v371
        %866 = vmatmul.mubr.f32.gmra.mrb[0].mxu0 %v370
        %v867 = vpop.f32.mrb[0].mxu0
        %v868 = vadd.f32 %v659, %v867
        %v869 = vpop.f32.mrb[0].mxu0
        %v870 = vadd.f32 %v661, %v869
        %871 = vmatprep.mubr.f32.mxu0 %v375
        %872 = vmatmul.mubr.f32.gmra.mrb[0].mxu0 %v374
        %v873 = vpop.f32.mrb[0].mxu0
        %v874 = vadd.f32 %v665, %v873
        %v875 = vpop.f32.mrb[0].mxu0
        %v876 = vadd.f32 %v667, %v875
        %877 = vmatprep.mubr.f32.mxu0 %v379
        %878 = vmatmul.mubr.f32.gmra.mrb[0].mxu0 %v378
        %v879 = vpop.f32.mrb[0].mxu0
        %v880 = vadd.f32 %v671, %v879
        %v881 = vpop.f32.mrb[0].mxu0
        %v882 = vadd.f32 %v673, %v881
        %883 = vmatprep.mubr.f32.mxu0 %v383
        %884 = vmatmul.mubr.f32.gmra.mrb[0].mxu0 %v382
        %v885 = vpop.f32.mrb[0].mxu0
        %v886 = vadd.f32 %v677, %v885
        %v887 = vpop.f32.mrb[0].mxu0
        %v888 = vadd.f32 %v679, %v887
        %889 = vmatprep.mubr.f32.mxu0 %v387
        %890 = vmatmul.mubr.f32.gmra.mrb[0].mxu0 %v386
        %v891 = vpop.f32.mrb[0].mxu0
        %v892 = vadd.f32 %v683, %v891
        %v893 = vpop.f32.mrb[0].mxu0
        %v894 = vadd.f32 %v685, %v893
        %895 = vmatprep.mubr.f32.mxu0 %v391
        %896 = vmatmul.mubr.f32.gmra.mrb[0].mxu0 %v390
        %v897 = vpop.f32.mrb[0].mxu0
        %v898 = vadd.f32 %v689, %v897
        %v899 = vpop.f32.mrb[0].mxu0
        %v900 = vadd.f32 %v691, %v899
        %901 = vmatprep.mubr.f32.mxu0 %v395
        %902 = vmatmul.mubr.f32.gmra.mrb[0].mxu0 %v394
        %v903 = vpop.f32.mrb[0].mxu0
        %v904 = vadd.f32 %v695, %v903
        %v905 = vpop.f32.mrb[0].mxu0
        %v906 = vadd.f32 %v697, %v905
        %907 = vmatprep.mubr.f32.mxu0 %v399
        %908 = vmatmul.mubr.f32.gmra.mrb[0].mxu0 %v398
        %v909 = vpop.f32.mrb[0].mxu0
        %v910 = vadd.f32 %v701, %v909
        %v911 = vpop.f32.mrb[0].mxu0
        %v912 = vadd.f32 %v703, %v911
        %913 = vmatprep.mubr.f32.mxu0 %v403
        %914 = vmatmul.mubr.f32.gmra.mrb[0].mxu0 %v402
        %v915 = vpop.f32.mrb[0].mxu0
        %v916 = vadd.f32 %v707, %v915
        %v917 = vpop.f32.mrb[0].mxu0
        %v918 = vadd.f32 %v709, %v917
        %919 = vmatprep.mubr.f32.mxu0 %v407
        %920 = vmatmul.mubr.f32.gmra.mrb[0].mxu0 %v406
        %v921 = vpop.f32.mrb[0].mxu0
        %v922 = vadd.f32 %v713, %v921
        %v923 = vpop.f32.mrb[0].mxu0
        %v924 = vadd.f32 %v715, %v923
        %925 = vmatprep.mubr.f32.mxu0 %v411
        %926 = vmatmul.mubr.f32.gmra.mrb[0].mxu0 %v410
        %v927 = vpop.f32.mrb[0].mxu0
        %v928 = vadd.f32 %v719, %v927
        %v929 = vpop.f32.mrb[0].mxu0
        %v930 = vadd.f32 %v721, %v929
        %931 = vmatprep.mubr.f32.mxu0 %v415
        %932 = vmatmul.mubr.f32.gmra.mrb[0].mxu0 %v414
        %v933 = vpop.f32.mrb[0].mxu0
        %v934 = vadd.f32 %v725, %v933
        %v935 = vpop.f32.mrb[0].mxu0
        %v936 = vadd.f32 %v727, %v935
        %937 = vmatprep.mubr.f32.mxu0 %v419
        %938 = vmatmul.mubr.f32.gmra.mrb[0].mxu0 %v418
        %v939 = vpop.f32.mrb[0].mxu0
        %v940 = vadd.f32 %v731, %v939
        %v941 = vpop.f32.mrb[0].mxu0
        %v942 = vadd.f32 %v733, %v941
        %943 = vmatprep.mubr.f32.mxu0 %v423
        %944 = vmatmul.mubr.f32.gmra.mrb[0].mxu0 %v422
        %v945 = vpop.f32.mrb[0].mxu0
        %v946 = vadd.f32 %v737, %v945
        %v947 = vpop.f32.mrb[0].mxu0
        %v948 = vadd.f32 %v739, %v947
        %949 = vmatprep.mubr.f32.mxu0 %v427
        %950 = vmatmul.mubr.f32.gmra.mrb[0].mxu0 %v426
        %v951 = vpop.f32.mrb[0].mxu0
        %v952 = vadd.f32 %v743, %v951
        %v953 = vpop.f32.mrb[0].mxu0
        %v954 = vadd.f32 %v745, %v953
        %955 = vmatprep.mubr.f32.mxu0 %v431
        %956 = vmatmul.mubr.f32.gmra.mrb[0].mxu0 %v430
        %v957 = vpop.f32.mrb[0].mxu0
        %v958 = vadd.f32 %v749, %v957
        %v959 = vpop.f32.mrb[0].mxu0
        %v960 = vadd.f32 %v751, %v959
        %961 = vmatprep.mubr.f32.mxu0 %v435
        %962 = vmatmul.mubr.f32.gmra.mrb[0].mxu0 %v434
        %v963 = vpop.f32.mrb[0].mxu0
        %v964 = vadd.f32 %v755, %v963
        %v965 = vpop.f32.mrb[0].mxu0
        %v966 = vadd.f32 %v757, %v965
        %967 = vmatprep.mubr.f32.mxu0 %v439
        %968 = vmatmul.mubr.f32.gmra.mrb[0].mxu0 %v438
        %v969 = vpop.f32.mrb[0].mxu0
        %v970 = vadd.f32 %v761, %v969
        %v971 = vpop.f32.mrb[0].mxu0
        %v972 = vadd.f32 %v763, %v971
        %973 = vmatprep.mubr.f32.mxu0 %v443
        %974 = vmatmul.mubr.f32.gmra.mrb[0].mxu0 %v442
        %v975 = vpop.f32.mrb[0].mxu0
        %v976 = vadd.f32 %v767, %v975
        %v977 = vpop.f32.mrb[0].mxu0
        %v978 = vadd.f32 %v769, %v977
        %979 = vmatprep.mubr.f32.mxu0 %v447
        %980 = vmatmul.mubr.f32.gmra.mrb[0].mxu0 %v446
        %v981 = vpop.f32.mrb[0].mxu0
        %v982 = vadd.f32 %v773, %v981
        %v983 = vpop.f32.mrb[0].mxu0
        %v984 = vadd.f32 %v775, %v983
        %985 = vmatprep.mubr.f32.mxu0 %v451
        %986 = vmatmul.mubr.f32.gmra.mrb[0].mxu0 %v450
        %v987 = vpop.f32.mrb[0].mxu0
        %v988 = vadd.f32 %v779, %v987
        %v989 = vpop.f32.mrb[0].mxu0
        %v990 = vadd.f32 %v781, %v989
        %991 = vmatprep.mubr.f32.mxu0 %v455
        %992 = vmatmul.mubr.f32.gmra.mrb[0].mxu0 %v454
        %v993 = vpop.f32.mrb[0].mxu0
        %v994 = vadd.f32 %v785, %v993
        %v995 = vpop.f32.mrb[0].mxu0
        %v996 = vadd.f32 %v787, %v995
        %997 = vmatprep.mubr.f32.mxu0 %v459
        %998 = vmatmul.mubr.f32.gmra.mrb[0].mxu0 %v458
        %v999 = vpop.f32.mrb[0].mxu0
        %v1000 = vadd.f32 %v791, %v999
        %v1001 = vpop.f32.mrb[0].mxu0
        %v1002 = vadd.f32 %v793, %v1001
        %1003 = vmatprep.mubr.f32.mxu0 %v463
        %1004 = vmatmul.mubr.f32.gmra.mrb[0].mxu0 %v462
        %v1005 = vpop.f32.mrb[0].mxu0
        %v1006 = vadd.f32 %v797, %v1005
        %v1007 = vpop.f32.mrb[0].mxu0
        %v1008 = vadd.f32 %v799, %v1007
        %1009 = vdwg.mxu0
        %v1010 = vadd.f32 %v320, %v868
        %v1011 = vadd.f32 %v321, %v870
        %v1012 = vadd.f32 %v322, %v874
        %v1013 = vadd.f32 %v323, %v876
        %v1014 = vadd.f32 %v324, %v880
        %v1015 = vadd.f32 %v325, %v882
        %v1016 = vadd.f32 %v326, %v886
        %v1017 = vadd.f32 %v327, %v888
        %v1018 = vadd.f32 %v328, %v892
        %v1019 = vadd.f32 %v329, %v894
        %v1020 = vadd.f32 %v330, %v898
        %v1021 = vadd.f32 %v331, %v900
        %v1022 = vadd.f32 %v332, %v904
        %v1023 = vadd.f32 %v333, %v906
        %v1024 = vadd.f32 %v334, %v910
        %v1025 = vadd.f32 %v335, %v912
        %v1026 = vadd.f32 %v336, %v916
        %v1027 = vadd.f32 %v337, %v918
        %v1028 = vadd.f32 %v338, %v922
        %v1029 = vadd.f32 %v339, %v924
        %v1030 = vadd.f32 %v340, %v928
        %v1031 = vadd.f32 %v341, %v930
        %v1032 = vadd.f32 %v342, %v934
        %v1033 = vadd.f32 %v343, %v936
        %v1034 = vadd.f32 %v344, %v940
        %v1035 = vadd.f32 %v345, %v942
        %v1036 = vadd.f32 %v346, %v946
        %v1037 = vadd.f32 %v347, %v948
        %v1038 = vadd.f32 %v348, %v952
        %v1039 = vadd.f32 %v349, %v954
        %v1040 = vadd.f32 %v350, %v958
        %v1041 = vadd.f32 %v351, %v960
        %v1042 = vadd.f32 %v352, %v964
        %v1043 = vadd.f32 %v353, %v966
        %v1044 = vadd.f32 %v354, %v970
        %v1045 = vadd.f32 %v355, %v972
        %v1046 = vadd.f32 %v356, %v976
        %v1047 = vadd.f32 %v357, %v978
        %v1048 = vadd.f32 %v358, %v982
        %v1049 = vadd.f32 %v359, %v984
        %v1050 = vadd.f32 %v360, %v988
        %v1051 = vadd.f32 %v361, %v990
        %v1052 = vadd.f32 %v362, %v994
        %v1053 = vadd.f32 %v363, %v996
        %v1054 = vadd.f32 %v364, %v1000
        %v1055 = vadd.f32 %v365, %v1002
        %v1056 = vadd.f32 %v366, %v1006
        %v1057 = vadd.f32 %v367, %v1008
        %1058 = vst [vmem:[#allocation2] sm:$0xff] %v1010
        %1059 = vst [vmem:[#allocation2 + $0x8] sm:$0xff] %v1011
        %1060 = vst [vmem:[#allocation2 + $0x10] sm:$0xff] %v1012
        %1061 = vst [vmem:[#allocation2 + $0x18] sm:$0xff] %v1013
        %1062 = vst [vmem:[#allocation2 + $0x20] sm:$0xff] %v1014
        %1063 = vst [vmem:[#allocation2 + $0x28] sm:$0xff] %v1015
        %1064 = vst [vmem:[#allocation2 + $0x30] sm:$0xff] %v1016
        %1065 = vst [vmem:[#allocation2 + $0x38] sm:$0xff] %v1017
        %1066 = vst [vmem:[#allocation2 + $0x40] sm:$0xff] %v1018
        %1067 = vst [vmem:[#allocation2 + $0x48] sm:$0xff] %v1019
        %1068 = vst [vmem:[#allocation2 + $0x50] sm:$0xff] %v1020
        %1069 = vst [vmem:[#allocation2 + $0x58] sm:$0xff] %v1021
        %1070 = vst [vmem:[#allocation2 + $0x60] sm:$0xff] %v1022
        %1071 = vst [vmem:[#allocation2 + $0x68] sm:$0xff] %v1023
        %1072 = vst [vmem:[#allocation2 + $0x70] sm:$0xff] %v1024
        %1073 = vst [vmem:[#allocation2 + $0x78] sm:$0xff] %v1025
        %1074 = vst [vmem:[#allocation2 + $0x80] sm:$0xff] %v1026
        %1075 = vst [vmem:[#allocation2 + $0x88] sm:$0xff] %v1027
        %1076 = vst [vmem:[#allocation2 + $0x90] sm:$0xff] %v1028
        %1077 = vst [vmem:[#allocation2 + $0x98] sm:$0xff] %v1029
        %1078 = vst [vmem:[#allocation2 + $0xa0] sm:$0xff] %v1030
        %1079 = vst [vmem:[#allocation2 + $0xa8] sm:$0xff] %v1031
        %1080 = vst [vmem:[#allocation2 + $0xb0] sm:$0xff] %v1032
        %1081 = vst [vmem:[#allocation2 + $0xb8] sm:$0xff] %v1033
        %1082 = vst [vmem:[#allocation2 + $0xc0] sm:$0xff] %v1034
        %1083 = vst [vmem:[#allocation2 + $0xc8] sm:$0xff] %v1035
        %1084 = vst [vmem:[#allocation2 + $0xd0] sm:$0xff] %v1036
        %1085 = vst [vmem:[#allocation2 + $0xd8] sm:$0xff] %v1037
        %1086 = vst [vmem:[#allocation2 + $0xe0] sm:$0xff] %v1038
        %1087 = vst [vmem:[#allocation2 + $0xe8] sm:$0xff] %v1039
        %1088 = vst [vmem:[#allocation2 + $0xf0] sm:$0xff] %v1040
        %1089 = vst [vmem:[#allocation2 + $0xf8] sm:$0xff] %v1041
        %1090 = vst [vmem:[#allocation2 + $0x100] sm:$0xff] %v1042
        %1091 = vst [vmem:[#allocation2 + $0x108] sm:$0xff] %v1043
        %1092 = vst [vmem:[#allocation2 + $0x110] sm:$0xff] %v1044
        %1093 = vst [vmem:[#allocation2 + $0x118] sm:$0xff] %v1045
        %1094 = vst [vmem:[#allocation2 + $0x120] sm:$0xff] %v1046
        %1095 = vst [vmem:[#allocation2 + $0x128] sm:$0xff] %v1047
        %1096 = vst [vmem:[#allocation2 + $0x130] sm:$0xff] %v1048
        %1097 = vst [vmem:[#allocation2 + $0x138] sm:$0xff] %v1049
        %1098 = vst [vmem:[#allocation2 + $0x140] sm:$0xff] %v1050
        %1099 = vst [vmem:[#allocation2 + $0x148] sm:$0xff] %v1051
        %1100 = vst [vmem:[#allocation2 + $0x150] sm:$0xff] %v1052
        %1101 = vst [vmem:[#allocation2 + $0x158] sm:$0xff] %v1053
        %1102 = vst [vmem:[#allocation2 + $0x160] sm:$0xff] %v1054
        %1103 = vst [vmem:[#allocation2 + $0x168] sm:$0xff] %v1055
        %1104 = vst [vmem:[#allocation2 + $0x170] sm:$0xff] %v1056
        %1105 = vst [vmem:[#allocation2 + $0x178] sm:$0xff] %v1057
        // Predicated region
        $region45: #{tpu_custom_call.1} parent=31 // pred_check
          %p1106 = pneg %p268
        $region46: #{tpu_custom_call.1} parent=31 // pred_check_branch
          %1108 = sbr.rel (%p1106) target = $region48
        $region47: #{tpu_custom_call.1} parent=31 // pred_region
          %v1109 = vld [vmem:[#allocation2] sm:$0xff]
          %v1110 = vld [vmem:[#allocation2 + $0x8] sm:$0xff]
          %v1111 = vld [vmem:[#allocation2 + $0x10] sm:$0xff]
          %v1112 = vld [vmem:[#allocation2 + $0x18] sm:$0xff]
          %v1113 = vld [vmem:[#allocation2 + $0x20] sm:$0xff]
          %v1114 = vld [vmem:[#allocation2 + $0x28] sm:$0xff]
          %v1115 = vld [vmem:[#allocation2 + $0x30] sm:$0xff]
          %v1116 = vld [vmem:[#allocation2 + $0x38] sm:$0xff]
          %v1117 = vld [vmem:[#allocation2 + $0x40] sm:$0xff]
          %v1118 = vld [vmem:[#allocation2 + $0x48] sm:$0xff]
          %v1119 = vld [vmem:[#allocation2 + $0x50] sm:$0xff]
          %v1120 = vld [vmem:[#allocation2 + $0x58] sm:$0xff]
          %v1121 = vld [vmem:[#allocation2 + $0x60] sm:$0xff]
          %v1122 = vld [vmem:[#allocation2 + $0x68] sm:$0xff]
          %v1123 = vld [vmem:[#allocation2 + $0x70] sm:$0xff]
          %v1124 = vld [vmem:[#allocation2 + $0x78] sm:$0xff]
          %v1125 = vld [vmem:[#allocation2 + $0x80] sm:$0xff]
          %v1126 = vld [vmem:[#allocation2 + $0x88] sm:$0xff]
          %v1127 = vld [vmem:[#allocation2 + $0x90] sm:$0xff]
          %v1128 = vld [vmem:[#allocation2 + $0x98] sm:$0xff]
          %v1129 = vld [vmem:[#allocation2 + $0xa0] sm:$0xff]
          %v1130 = vld [vmem:[#allocation2 + $0xa8] sm:$0xff]
          %v1131 = vld [vmem:[#allocation2 + $0xb0] sm:$0xff]
          %v1132 = vld [vmem:[#allocation2 + $0xb8] sm:$0xff]
          %v1133 = vld [vmem:[#allocation2 + $0xc0] sm:$0xff]
          %v1134 = vld [vmem:[#allocation2 + $0xc8] sm:$0xff]
          %v1135 = vld [vmem:[#allocation2 + $0xd0] sm:$0xff]
          %v1136 = vld [vmem:[#allocation2 + $0xd8] sm:$0xff]
          %v1137 = vld [vmem:[#allocation2 + $0xe0] sm:$0xff]
          %v1138 = vld [vmem:[#allocation2 + $0xe8] sm:$0xff]
          %v1139 = vld [vmem:[#allocation2 + $0xf0] sm:$0xff]
          %v1140 = vld [vmem:[#allocation2 + $0xf8] sm:$0xff]
          %v1141 = vld [vmem:[#allocation2 + $0x100] sm:$0xff]
          %v1142 = vld [vmem:[#allocation2 + $0x108] sm:$0xff]
          %v1143 = vld [vmem:[#allocation2 + $0x110] sm:$0xff]
          %v1144 = vld [vmem:[#allocation2 + $0x118] sm:$0xff]
          %v1145 = vld [vmem:[#allocation2 + $0x120] sm:$0xff]
          %v1146 = vld [vmem:[#allocation2 + $0x128] sm:$0xff]
          %v1147 = vld [vmem:[#allocation2 + $0x130] sm:$0xff]
          %v1148 = vld [vmem:[#allocation2 + $0x138] sm:$0xff]
          %v1149 = vld [vmem:[#allocation2 + $0x140] sm:$0xff]
          %v1150 = vld [vmem:[#allocation2 + $0x148] sm:$0xff]
          %v1151 = vld [vmem:[#allocation2 + $0x150] sm:$0xff]
          %v1152 = vld [vmem:[#allocation2 + $0x158] sm:$0xff]
          %v1153 = vld [vmem:[#allocation2 + $0x160] sm:$0xff]
          %v1154 = vld [vmem:[#allocation2 + $0x168] sm:$0xff]
          %v1155 = vld [vmem:[#allocation2 + $0x170] sm:$0xff]
          %v1156 = vld [vmem:[#allocation2 + $0x178] sm:$0xff]
          %v1157 = vld [vmem:[%s264] sm:$0x3]
          %v1159 = vlaneseq
          %v1160 = vshrl.u32 %v1159, 7
          %v1161 = vsub.s32 0, %v1160
          %v1162 = vrot.slane %v1157, %v1161
          %v1163 = vlaneseq
          %v1164 = vshrl.u32 %v1163, 7
          %v1165 = vsub.s32 1, %v1164
          %v1166 = vrot.slane %v1157, %v1165
          %v1169 = vadd.f32 %v1109, %v1162
          %v1170 = vadd.f32 %v1110, %v1166
          %v1171 = vadd.f32 %v1111, %v1162
          %v1172 = vadd.f32 %v1112, %v1166
          %v1173 = vadd.f32 %v1113, %v1162
          %v1174 = vadd.f32 %v1114, %v1166
          %v1175 = vadd.f32 %v1115, %v1162
          %v1176 = vadd.f32 %v1116, %v1166
          %v1177 = vadd.f32 %v1117, %v1162
          %v1178 = vadd.f32 %v1118, %v1166
          %v1179 = vadd.f32 %v1119, %v1162
          %v1180 = vadd.f32 %v1120, %v1166
          %v1181 = vadd.f32 %v1121, %v1162
          %v1182 = vadd.f32 %v1122, %v1166
          %v1183 = vadd.f32 %v1123, %v1162
          %v1184 = vadd.f32 %v1124, %v1166
          %v1185 = vadd.f32 %v1125, %v1162
          %v1186 = vadd.f32 %v1126, %v1166
          %v1187 = vadd.f32 %v1127, %v1162
          %v1188 = vadd.f32 %v1128, %v1166
          %v1189 = vadd.f32 %v1129, %v1162
          %v1190 = vadd.f32 %v1130, %v1166
          %v1191 = vadd.f32 %v1131, %v1162
          %v1192 = vadd.f32 %v1132, %v1166
          %v1193 = vadd.f32 %v1133, %v1162
          %v1194 = vadd.f32 %v1134, %v1166
          %v1195 = vadd.f32 %v1135, %v1162
          %v1196 = vadd.f32 %v1136, %v1166
          %v1197 = vadd.f32 %v1137, %v1162
          %v1198 = vadd.f32 %v1138, %v1166
          %v1199 = vadd.f32 %v1139, %v1162
          %v1200 = vadd.f32 %v1140, %v1166
          %v1201 = vadd.f32 %v1141, %v1162
          %v1202 = vadd.f32 %v1142, %v1166
          %v1203 = vadd.f32 %v1143, %v1162
          %v1204 = vadd.f32 %v1144, %v1166
          %v1205 = vadd.f32 %v1145, %v1162
          %v1206 = vadd.f32 %v1146, %v1166
          %v1207 = vadd.f32 %v1147, %v1162
          %v1208 = vadd.f32 %v1148, %v1166
          %v1209 = vadd.f32 %v1149, %v1162
          %v1210 = vadd.f32 %v1150, %v1166
          %v1211 = vadd.f32 %v1151, %v1162
          %v1212 = vadd.f32 %v1152, %v1166
          %v1213 = vadd.f32 %v1153, %v1162
          %v1214 = vadd.f32 %v1154, %v1166
          %v1215 = vadd.f32 %v1155, %v1162
          %v1216 = vadd.f32 %v1156, %v1166
          %1217 = vst [vmem:[%s256] sm:$0xff] %v1169
          %1218 = vst [vmem:[%s256 + $0x8] sm:$0xff] %v1170
          %1219 = vst [vmem:[%s256 + $0x10] sm:$0xff] %v1171
          %1220 = vst [vmem:[%s256 + $0x18] sm:$0xff] %v1172
          %1221 = vst [vmem:[%s256 + $0x20] sm:$0xff] %v1173
          %1222 = vst [vmem:[%s256 + $0x28] sm:$0xff] %v1174
          %1223 = vst [vmem:[%s256 + $0x30] sm:$0xff] %v1175
          %1224 = vst [vmem:[%s256 + $0x38] sm:$0xff] %v1176
          %1225 = vst [vmem:[%s256 + $0x40] sm:$0xff] %v1177
          %1226 = vst [vmem:[%s256 + $0x48] sm:$0xff] %v1178
          %1227 = vst [vmem:[%s256 + $0x50] sm:$0xff] %v1179
          %1228 = vst [vmem:[%s256 + $0x58] sm:$0xff] %v1180
          %1229 = vst [vmem:[%s256 + $0x60] sm:$0xff] %v1181
          %1230 = vst [vmem:[%s256 + $0x68] sm:$0xff] %v1182
          %1231 = vst [vmem:[%s256 + $0x70] sm:$0xff] %v1183
          %1232 = vst [vmem:[%s256 + $0x78] sm:$0xff] %v1184
          %1233 = vst [vmem:[%s256 + $0x80] sm:$0xff] %v1185
          %1234 = vst [vmem:[%s256 + $0x88] sm:$0xff] %v1186
          %1235 = vst [vmem:[%s256 + $0x90] sm:$0xff] %v1187
          %1236 = vst [vmem:[%s256 + $0x98] sm:$0xff] %v1188
          %1237 = vst [vmem:[%s256 + $0xa0] sm:$0xff] %v1189
          %1238 = vst [vmem:[%s256 + $0xa8] sm:$0xff] %v1190
          %1239 = vst [vmem:[%s256 + $0xb0] sm:$0xff] %v1191
          %1240 = vst [vmem:[%s256 + $0xb8] sm:$0xff] %v1192
          %1241 = vst [vmem:[%s256 + $0xc0] sm:$0xff] %v1193
          %1242 = vst [vmem:[%s256 + $0xc8] sm:$0xff] %v1194
          %1243 = vst [vmem:[%s256 + $0xd0] sm:$0xff] %v1195
          %1244 = vst [vmem:[%s256 + $0xd8] sm:$0xff] %v1196
          %1245 = vst [vmem:[%s256 + $0xe0] sm:$0xff] %v1197
          %1246 = vst [vmem:[%s256 + $0xe8] sm:$0xff] %v1198
          %1247 = vst [vmem:[%s256 + $0xf0] sm:$0xff] %v1199
          %1248 = vst [vmem:[%s256 + $0xf8] sm:$0xff] %v1200
          %1249 = vst [vmem:[%s256 + $0x100] sm:$0xff] %v1201
          %1250 = vst [vmem:[%s256 + $0x108] sm:$0xff] %v1202
          %1251 = vst [vmem:[%s256 + $0x110] sm:$0xff] %v1203
          %1252 = vst [vmem:[%s256 + $0x118] sm:$0xff] %v1204
          %1253 = vst [vmem:[%s256 + $0x120] sm:$0xff] %v1205
          %1254 = vst [vmem:[%s256 + $0x128] sm:$0xff] %v1206
          %1255 = vst [vmem:[%s256 + $0x130] sm:$0xff] %v1207
          %1256 = vst [vmem:[%s256 + $0x138] sm:$0xff] %v1208
          %1257 = vst [vmem:[%s256 + $0x140] sm:$0xff] %v1209
          %1258 = vst [vmem:[%s256 + $0x148] sm:$0xff] %v1210
          %1259 = vst [vmem:[%s256 + $0x150] sm:$0xff] %v1211
          %1260 = vst [vmem:[%s256 + $0x158] sm:$0xff] %v1212
          %1261 = vst [vmem:[%s256 + $0x160] sm:$0xff] %v1213
          %1262 = vst [vmem:[%s256 + $0x168] sm:$0xff] %v1214
          %1263 = vst [vmem:[%s256 + $0x170] sm:$0xff] %v1215
          %1264 = vst [vmem:[%s256 + $0x178] sm:$0xff] %v1216
        $region48: #{tpu_custom_call.1} parent=31 // pred_fallthru
          _
        %s1265 = sand.u32 %s132, 1
        %s1266 = scalar_lea.sflag [#allocation5], %s1265
        %s1267 = sand.u32 %s132, 1
        %s1268 = smul.addr %s1267, 384
        %s1269 = scalar_lea.vmem [#allocation8], %s1268
        // Predicated region
        $region49: #{tpu_custom_call.1} parent=31 // pred_check
          %p1270 = pneg %p142
        $region50: #{tpu_custom_call.1} parent=31 // pred_check_branch
          %1272 = sbr.rel (%p1270) target = $region52
        $region51: #{tpu_custom_call.1} parent=31 // pred_region
          %s1273 = smul.u32 24, %s26
          %s1274 = smul.u32 2, %s27
          %s1276 = ssub.s32 6144, 6144
          %1277 = vsyncadd %s1266, %s1276
          %s1278 = smul.addr %s1273, 2
          %s1279 = sadd.s32 %s1274, %s1278
          %s1280 = smul.addr %s1279, 128
          %s1281 = scalar_lea.hbm %s3, %s1280
          %s1282 = sshll.u32 %s1269, 4
          %s1283 = int_to_ptr.vmem [resolvable:$true] %s1282
          %1288 = dma.vmem_to_hbm [thread:$0]  %s1283, 6144, %s1281, %s1266, 256, 256, 16
        $region52: #{tpu_custom_call.1} parent=31 // pred_fallthru
          _
      $region32: #{tpu_custom_call.1} parent=5 // pred_fallthru
        _
      %p1289 = scmp.le.s32.totalorder 2, %s16
      // Predicated region
      $region53: #{tpu_custom_call.1} parent=5 // pred_check
        %p1290 = pneg %p1289
      $region54: #{tpu_custom_call.1} parent=5 // pred_check_branch
        %1292 = sbr.rel (%p1290) target = $region56
      $region55: #{tpu_custom_call.1} parent=5 // pred_region
        %s1293 = ssub.s32 %s16, 2
        // Predicated region
        $region57: #{tpu_custom_call.1} parent=55 // pred_check
          %p1294 = pneg %p148
        $region58: #{tpu_custom_call.1} parent=55 // pred_check_branch
          %1296 = sbr.rel (%p1294) target = $region60
        $region59: #{tpu_custom_call.1} parent=55 // pred_region
          %s1297 = sand.u32 %s133, 1
          %s1298 = scalar_lea.sflag [#allocation5], %s1297
          %s1299 = sand.u32 %s133, 1
          %s1300 = smul.addr %s1299, 384
          %s1301 = scalar_lea.vmem [#allocation8], %s1300
          %1302 = dma.done %s1298, 6144
        $region60: #{tpu_custom_call.1} parent=55 // pred_fallthru
          _
      $region56: #{tpu_custom_call.1} parent=5 // pred_fallthru
        _
    $region6: #{tpu_custom_call.1} parent=1 // loop_footer
      %s20 = sadd.s32 1, %s16
    $region7: #{tpu_custom_call.1} parent=1 // loop_footer_branch
      %15 = sbr.rel target = $region3
    $region8: #{tpu_custom_call.1} parent=1 // loop_exit
      _
    %1303 = vsyncpa [#allocation4], 1
    %s1304 = scalar_lea.sflag [#allocation4], 1
    %1305 = vsyncpa %s1304, 1
    %1306 = vsyncpa [#allocation7], 1
    %1307 = vsyncpa [#allocation5], 1
    %s1308 = scalar_lea.sflag [#allocation5], 1
    %1309 = vsyncpa %s1308, 1

</llo_original>
